<compile_context>
chip_gen: v5e
topology: v5e:2x2
jax: 0.10.0
libtpu: 0.0.40
codegen_flags: <defaults>
</compile_context>

<pallas_src>
import functools

import jax
import jax.numpy as jnp
import numpy as np
from jax.experimental import pallas as pl
from jax.experimental.pallas import tpu as pltpu

LANE = 128                # output feature dims padded to multiples of this
SUBLANE = 16              # bf16 sublane packing: batch tile multiple of this
DEFAULT_BLOCK_B = 1024    # production batch tile (demo below uses 128)


def _round_up(x, m):
    return ((x + m - 1) // m) * m


def _siren_layer_kernel(x_ref, w_ref, b_ref, o_ref, *, apply_sine: bool):
    # x_ref: (TB, IN) bf16    w_ref: (IN, OUT) bf16  (omega_0 folded in)
    # b_ref: (1, OUT) f32     o_ref: (TB, OUT)
    acc = jnp.dot(x_ref[...], w_ref[...], preferred_element_type=jnp.float32)
    acc = acc + b_ref[...]                     # broadcast (1, OUT) over rows
    if apply_sine:
        acc = jnp.sin(acc)                     # f32 epilogue on VPU/EUP
    o_ref[...] = acc.astype(o_ref.dtype)


def siren_dense(x, w, b, *, apply_sine, out_dtype, block_b=DEFAULT_BLOCK_B):
    """One SIREN layer.  x: (B, IN) bf16; w: (IN, OUT) bf16 (pre-transposed,
    omega folded); b: (1, OUT) f32 (omega folded).  Returns (B, OUT)."""
    B, IN = x.shape
    IN_w, OUT = w.shape
    assert IN == IN_w and b.shape == (1, OUT)

    # Fixed batch tile, rounded to the bf16 sublane multiple, never larger
    # than the (rounded-up) batch.  Realistic SIREN batches (1e5-1e6 coords)
    # therefore always get a many-block "parallel" grid.
    block_b = min(int(block_b), _round_up(B, SUBLANE))
    block_b = max(SUBLANE, _round_up(block_b, SUBLANE))
    grid = (pl.cdiv(B, block_b),)

    kernel = functools.partial(_siren_layer_kernel, apply_sine=apply_sine)
    return pl.pallas_call(
        kernel,
        out_shape=jax.ShapeDtypeStruct((B, OUT), out_dtype),
        grid_spec=pltpu.PrefetchScalarGridSpec(
            num_scalar_prefetch=0,
            grid=grid,
            in_specs=[
                pl.BlockSpec((block_b, IN), lambda i: (i, 0)),   # streamed x
                pl.BlockSpec((IN, OUT), lambda i: (0, 0)),       # resident W
                pl.BlockSpec((1, OUT), lambda i: (0, 0)),        # resident b
            ],
            out_specs=pl.BlockSpec((block_b, OUT), lambda i: (i, 0)),
        ),
        compiler_params=pltpu.CompilerParams(
            dimension_semantics=("parallel",),
        ),
    )(x, w, b)


def init_siren_params(key, in_features=3, hidden_features=128, hidden_layers=2,
                      out_features=3, outermost_linear=True,
                      first_omega_0=30.0, hidden_omega_0=30.0):
    """SIREN parameters matching the PyTorch init, prepared for the kernel:
    pre-transposed to (IN, OUT), omega_0 folded into W and b for sine layers,
    OUT padded to a multiple of 128 (lane-dense stores), weights cast bf16."""
    cfgs = [(in_features, hidden_features, True, first_omega_0, True)]
    for _ in range(hidden_layers):
        cfgs.append((hidden_features, hidden_features, False, hidden_omega_0, True))
    # final layer
    cfgs.append((hidden_features, out_features, False, hidden_omega_0,
                 not outermost_linear))

    layers = []
    for fin, fout, is_first, omega, apply_sine in cfgs:
        key, kw, kb = jax.random.split(key, 3)
        if is_first:
            w_bound = 1.0 / fin
        else:
            w_bound = float(np.sqrt(6.0 / fin)) / omega
        weight = jax.random.uniform(kw, (fout, fin), jnp.float32, -w_bound, w_bound)
        b_bound = 1.0 / float(np.sqrt(fin))            # nn.Linear default bias init
        bias = jax.random.uniform(kb, (fout,), jnp.float32, -b_bound, b_bound)

        scale = omega if apply_sine else 1.0           # fold omega_0 once, here
        out_pad = _round_up(fout, LANE)
        w_prep = jnp.zeros((fin, out_pad), jnp.float32).at[:, :fout].set(scale * weight.T)
        b_prep = jnp.zeros((1, out_pad), jnp.float32).at[:, :fout].set(scale * bias)
        layers.append(dict(
            w=w_prep.astype(jnp.bfloat16),   # bf16 weight -> bf16 MXU path
            b=b_prep,                        # bias kept f32 for the epilogue
            apply_sine=apply_sine,
            out_features=fout,
        ))
    return layers


def siren_forward(normalized_coords, layers, *, block_b=DEFAULT_BLOCK_B):
    # TODO(synk): Boundary.periodic_condition_and_normalization and
    # Boundary.dirichlet_condition are not defined in the provided spec; this
    # implements the core SIREN MLP on already-normalized coordinates.
    x = normalized_coords
    n = len(layers)
    for i, layer in enumerate(layers):
        is_last = (i == n - 1)
        out_dtype = jnp.float32 if is_last else jnp.bfloat16
        y = siren_dense(x.astype(jnp.bfloat16), layer["w"], layer["b"],
                        apply_sine=layer["apply_sine"],
                        out_dtype=out_dtype, block_b=block_b)
        x = y[:, : layer["out_features"]]   # drop lane padding (no-op if none)
    return x


def siren_ref(normalized_coords, layers):
    """Pure-JAX reference using the same prepared params / dtypes."""
    x = normalized_coords
    n = len(layers)
    for i, layer in enumerate(layers):
        is_last = (i == n - 1)
        acc = jnp.dot(x.astype(jnp.bfloat16), layer["w"],
                      preferred_element_type=jnp.float32) + layer["b"]
        if layer["apply_sine"]:
            acc = jnp.sin(acc)
        out_dtype = jnp.float32 if is_last else jnp.bfloat16
        x = acc.astype(out_dtype)[:, : layer["out_features"]]
    return x


if __name__ == "__main__":
    key = jax.random.PRNGKey(0)
    k_x, k_p = jax.random.split(key)

    # Small demo shapes (real SIREN: hidden=512, hidden_layers=5, B ~ 1e5-1e6).
    batch = 512
    in_features = 3
    hidden_features = 128
    hidden_layers = 2
    out_features = 3

    coords = jax.random.uniform(k_x, (batch, in_features), jnp.float32, -1.0, 1.0)
    layers = init_siren_params(
        k_p, in_features=in_features, hidden_features=hidden_features,
        hidden_layers=hidden_layers, out_features=out_features,
        outermost_linear=True, first_omega_0=30.0, hidden_omega_0=30.0)

    # block_b=128 keeps the demo grid multi-block (4 steps) so pipelining and
    # the parallel batch axis are exercised; production default is 1024.
    out = siren_forward(coords, layers, block_b=128)
    out = jax.block_until_ready(out)
    assert out.shape == (batch, out_features)

    ref = siren_ref(coords, layers)
    np.testing.assert_allclose(np.asarray(out), np.asarray(ref),
                               rtol=1e-2, atol=1e-2)
    print("KERNEL_OK")
</pallas_src>

<mosaic_0001>
module attributes {stable_mosaic.version = 11 : i64} {
  func.func @_siren_layer_kernel(%arg0: i32, %arg1: memref<128x3xbf16, #tpu.memory_space<vmem>>, %arg2: memref<3x128xbf16, #tpu.memory_space<vmem>>, %arg3: memref<1x128xf32, #tpu.memory_space<vmem>>, %arg4: memref<128x128xbf16, #tpu.memory_space<vmem>>) attributes {dimension_semantics = [#tpu.dimension_semantics<parallel>], iteration_bounds = array<i64: 4>, scalar_prefetch = 0 : i64, scratch_operands = 0 : i64, tpu.core_type = #tpu.core_type<tc>, window_params = [{transform_indices = @transform_0, window_bounds = array<i64: 128, 3>}, {pipeline_mode = #tpu.pipeline_mode<synchronous>, transform_indices = @transform_1, window_bounds = array<i64: 3, 128>}, {pipeline_mode = #tpu.pipeline_mode<synchronous>, transform_indices = @transform_2, window_bounds = array<i64: 1, 128>}, {transform_indices = @transform_3, window_bounds = array<i64: 128, 128>}]} {
    %c0 = arith.constant 0 : index
    %c0_0 = arith.constant 0 : index
    %0 = vector.load %arg1[%c0, %c0_0] : memref<128x3xbf16, #tpu.memory_space<vmem>>, vector<128x3xbf16>
    %c0_1 = arith.constant 0 : index
    %c0_2 = arith.constant 0 : index
    %1 = vector.load %arg2[%c0_1, %c0_2] : memref<3x128xbf16, #tpu.memory_space<vmem>>, vector<3x128xbf16>
    %cst = arith.constant dense<0.000000e+00> : vector<128x128xf32>
    %2 = tpu.matmul %0, %1, %cst {dimension_numbers = #tpu.dot_dimension_numbers<[1], [0], [0], [1], [0, 0, 1, 1], [], []>} : vector<128x3xbf16>, vector<3x128xbf16>, vector<128x128xf32> -> vector<128x128xf32>
    %c0_3 = arith.constant 0 : index
    %c0_4 = arith.constant 0 : index
    %3 = vector.load %arg3[%c0_3, %c0_4] : memref<1x128xf32, #tpu.memory_space<vmem>>, vector<1x128xf32>
    %4 = vector.broadcast %3 : vector<1x128xf32> to vector<128x128xf32>
    %5 = arith.addf %2, %4 : vector<128x128xf32>
    %6 = math.sin %5 : vector<128x128xf32>
    %7 = arith.truncf %6 : vector<128x128xf32> to vector<128x128xbf16>
    %c0_5 = arith.constant 0 : index
    %c0_6 = arith.constant 0 : index
    %8 = vector.load %arg4[%c0_5, %c0_6] : memref<128x128xbf16, #tpu.memory_space<vmem>>, vector<128x128xbf16>
    tpu.vector_store %arg4[%c0_5, %c0_6], %7 {strides = array<i32>} : memref<128x128xbf16, #tpu.memory_space<vmem>>, vector<128x128xbf16>,
    return
  }
  func.func @transform_0(%arg0: i32) -> (i32, i32) {
    %c0_i32 = arith.constant 0 : i32
    %c0_i32_0 = arith.constant 0 : i32
    return %arg0, %c0_i32 : i32, i32
  }
  func.func @transform_1(%arg0: i32) -> (i32, i32) {
    %c0_i32 = arith.constant 0 : i32
    %c0_i32_0 = arith.constant 0 : i32
    %c0_i32_1 = arith.constant 0 : i32
    return %c0_i32, %c0_i32_0 : i32, i32
  }
  func.func @transform_2(%arg0: i32) -> (i32, i32) {
    %c0_i32 = arith.constant 0 : i32
    %c0_i32_0 = arith.constant 0 : i32
    %c0_i32_1 = arith.constant 0 : i32
    return %c0_i32, %c0_i32_0 : i32, i32
  }
  func.func @transform_3(%arg0: i32) -> (i32, i32) {
    %c0_i32 = arith.constant 0 : i32
    %c0_i32_0 = arith.constant 0 : i32
    return %arg0, %c0_i32 : i32, i32
  }
}

</mosaic_0001>

<llo_original>
// kernel: tpu_custom_call.1
$region0: #{tpu_custom_call.1}
  #allocation0 [shape = 'u32[]', space=smem, size = 0x4, offset = 0x4, fixed_abs, tag = 'smem constant byte address 0x4 - core index']
  #allocation1 [shape = 'u32[72,128]{1,0:T(1,128)}', space=vmem, size = 0x9000, scoped, tag = 'internal scratch']
  %s0 = inlined_call_operand.vmem [shape: bf16[512,3], index: 0, kind: input, shape index: {}]
  %s1 = inlined_call_operand.vmem [shape: bf16[3,128], index: 1, kind: input, shape index: {}]
  %s2 = inlined_call_operand.vmem [shape: f32[1,128], index: 2, kind: input, shape index: {}]
  %s3 = inlined_call_operand.hbm [shape: bf16[512,128], index: 3, kind: output, shape index: {}]
  %s4 = sld [smem:[#allocation0]]
  $region45: #{tpu_custom_call.1} parent=0
    _
  %s6 = ssub.s32 1, %s4
  %s7 = scalar_select 0, %s6, %s4
  $region1: #{tpu_custom_call.1} parent=0
    #allocation2 [shape = 'u8[65536]{0}', space=vmem, size = 0x10000, scoped, tag = 'output window, operand 0']
    #allocation3 [shape = 's32[2]{0}', space=sflag, size = 0x8, scoped, tag = 'scoped memory for tpu_custom_call.1']
    %8 = vsyncpa [#allocation3], 0
    %s9 = scalar_lea.sflag [#allocation3], 1
    %10 = vsyncpa %s9, 0
    loop: start=0, step=1, limit=6
    $region2: #{tpu_custom_call.1} parent=1 // loop_pre_header
      _
    $region3: #{tpu_custom_call.1} parent=1 // loop_header
      %s12 = sphi 0, %s16
      %p13 = scmp.ge.s32.totalorder %s12, 6
      %s22 = sphi 0, %s24
      %s25 = sphi 0, %s22
      %s26 = sphi 0, %s25
      %s42 = sphi 0, %s26
      %s46 = sphi 0, %s46
      %s48 = sphi 0, %s46
      %s49 = sphi 0, %s48
      %s63 = sphi 0, %s49
      %s67 = sphi 0, %s67
      %s69 = sphi 0, %s67
      %s70 = sphi 0, %s69
      %s84 = sphi 0, %s70
      %s90 = sphi 0, %s92
      %s93 = sphi 0, %s90
      %s94 = sphi 0, %s93
      %s110 = sphi 0, %s94
    $region4: #{tpu_custom_call.1} parent=1 // loop_header_branch
      %15 = sbr.rel (%p13) target = $region8
    $region5: #{tpu_custom_call.1} parent=1 // loop_body
      %s17 = ssub.s32 %s12, 1
      %s18 = ssub.s32 %s12, 2
      %s19 = sadd.s32 %s12, 1
      %s20 = ssub.s32 %s12, %s19
      %p21 = scmp.eq.s32.totalorder %s20, 0
      %s23 = sadd.s32 %s22, 1
      %s24 = scalar_select %p21, %s22, %s23
      %p27 = pneg %p21
      %p28 = scmp.eq.s32.totalorder %s12, 3
      %p29 = por %p27, %p28
      %p30 = scmp.ne.s32.totalorder %s22, %s25
      %p31 = scmp.eq.s32.totalorder %s12, 0
      %p32 = por %p30, %p31
      %p33 = scmp.ne.s32.totalorder %s22, %s25
      %p34 = scmp.eq.s32.totalorder %s17, 3
      %p35 = por %p33, %p34
      %p36 = scmp.ne.s32.totalorder %s25, %s26
      %p37 = scmp.eq.s32.totalorder %s17, 0
      %p38 = por %p36, %p37
      %p39 = scmp.ne.s32.totalorder %s25, %s26
      %p40 = scmp.eq.s32.totalorder %s18, 3
      %p41 = por %p39, %p40
      %p43 = scmp.ne.s32.totalorder %s26, %s42
      %p44 = scmp.eq.s32.totalorder %s18, 0
      %p45 = por %p43, %p44
      %s47 = sadd.s32 %s46, 1
      %p50 = scmp.eq.s32.totalorder %s12, 3
      %p51 = scmp.ne.s32.totalorder %s46, %s48
      %p52 = scmp.eq.s32.totalorder %s12, 0
      %p53 = por %p51, %p52
      %p54 = scmp.ne.s32.totalorder %s46, %s48
      %p55 = scmp.eq.s32.totalorder %s17, 3
      %p56 = por %p54, %p55
      %p57 = scmp.ne.s32.totalorder %s48, %s49
      %p58 = scmp.eq.s32.totalorder %s17, 0
      %p59 = por %p57, %p58
      %p60 = scmp.ne.s32.totalorder %s48, %s49
      %p61 = scmp.eq.s32.totalorder %s18, 3
      %p62 = por %p60, %p61
      %p64 = scmp.ne.s32.totalorder %s49, %s63
      %p65 = scmp.eq.s32.totalorder %s18, 0
      %p66 = por %p64, %p65
      %s68 = sadd.s32 %s67, 1
      %p71 = scmp.eq.s32.totalorder %s12, 3
      %p72 = scmp.ne.s32.totalorder %s67, %s69
      %p73 = scmp.eq.s32.totalorder %s12, 0
      %p74 = por %p72, %p73
      %p75 = scmp.ne.s32.totalorder %s67, %s69
      %p76 = scmp.eq.s32.totalorder %s17, 3
      %p77 = por %p75, %p76
      %p78 = scmp.ne.s32.totalorder %s69, %s70
      %p79 = scmp.eq.s32.totalorder %s17, 0
      %p80 = por %p78, %p79
      %p81 = scmp.ne.s32.totalorder %s69, %s70
      %p82 = scmp.eq.s32.totalorder %s18, 3
      %p83 = por %p81, %p82
      %p85 = scmp.ne.s32.totalorder %s70, %s84
      %p86 = scmp.eq.s32.totalorder %s18, 0
      %p87 = por %p85, %p86
      %s88 = ssub.s32 %s12, %s19
      %p89 = scmp.eq.s32.totalorder %s88, 0
      %s91 = sadd.s32 %s90, 1
      %s92 = scalar_select %p89, %s90, %s91
      %p95 = pneg %p89
      %p96 = scmp.eq.s32.totalorder %s12, 3
      %p97 = por %p95, %p96
      %p98 = scmp.ne.s32.totalorder %s90, %s93
      %p99 = scmp.eq.s32.totalorder %s12, 0
      %p100 = por %p98, %p99
      %p101 = scmp.ne.s32.totalorder %s90, %s93
      %p102 = scmp.eq.s32.totalorder %s17, 3
      %p103 = por %p101, %p102
      %p104 = scmp.ne.s32.totalorder %s93, %s94
      %p105 = scmp.eq.s32.totalorder %s17, 0
      %p106 = por %p104, %p105
      %p107 = scmp.ne.s32.totalorder %s93, %s94
      %p108 = scmp.eq.s32.totalorder %s18, 3
      %p109 = por %p107, %p108
      %p111 = scmp.ne.s32.totalorder %s94, %s110
      %p112 = scmp.eq.s32.totalorder %s18, 0
      %p113 = por %p111, %p112
      %p114 = scmp.le.s32.totalorder 1, %s12
      %p115 = scmp.lt.s32.totalorder %s12, 5
      %p116 = pnand %p114, %p115
      %p117 = pneg %p116
      // Predicated region
      $region9: #{tpu_custom_call.1} parent=5 // pred_check
        _
      $region10: #{tpu_custom_call.1} parent=5 // pred_check_branch
        %119 = sbr.rel (%p116) target = $region12
      $region11: #{tpu_custom_call.1} parent=5 // pred_region
        %s120 = ssub.s32 %s12, 1
        // Predicated region
        $region13: #{tpu_custom_call.1} parent=11 // pred_check
          %p121 = pneg %p59
        $region14: #{tpu_custom_call.1} parent=11 // pred_check_branch
          %123 = sbr.rel (%p121) target = $region16
        $region15: #{tpu_custom_call.1} parent=11 // pred_region
          _
        $region16: #{tpu_custom_call.1} parent=11 // pred_fallthru
          _
        // Predicated region
        $region17: #{tpu_custom_call.1} parent=11 // pred_check
          %p124 = pneg %p80
        $region18: #{tpu_custom_call.1} parent=11 // pred_check_branch
          %126 = sbr.rel (%p124) target = $region20
        $region19: #{tpu_custom_call.1} parent=11 // pred_region
          _
        $region20: #{tpu_custom_call.1} parent=11 // pred_fallthru
          _
      $region12: #{tpu_custom_call.1} parent=5 // pred_fallthru
        _
      %p127 = scmp.lt.s32.totalorder %s12, 4
      // Predicated region
      $region21: #{tpu_custom_call.1} parent=5 // pred_check
        %p128 = pneg %p127
      $region22: #{tpu_custom_call.1} parent=5 // pred_check_branch
        %130 = sbr.rel (%p128) target = $region24
      $region23: #{tpu_custom_call.1} parent=5 // pred_region
        // Predicated region
        $region25: #{tpu_custom_call.1} parent=23 // pred_check
          %p131 = pneg %p32
        $region26: #{tpu_custom_call.1} parent=23 // pred_check_branch
          %133 = sbr.rel (%p131) target = $region28
        $region27: #{tpu_custom_call.1} parent=23 // pred_region
          %s134 = smul.u32 16, %s12
          %p135 = scmp.lt.s32.totalorder %s134, 63
          %s136 = scalar_select %p135, %s134, 63
          %s137 = smul.addr %s136, 4
          %s138 = scalar_lea.vmem %s0, %s137
          %s139 = smul.u32 16, %s12
        $region28: #{tpu_custom_call.1} parent=23 // pred_fallthru
          _
      $region24: #{tpu_custom_call.1} parent=5 // pred_fallthru
        _
      %p140 = scmp.le.s32.totalorder 1, %s12
      %p141 = scmp.lt.s32.totalorder %s12, 5
      %p142 = pnand %p140, %p141
      %p143 = pneg %p142
      // Predicated region
      $region29: #{tpu_custom_call.1} parent=5 // pred_check
        _
      $region30: #{tpu_custom_call.1} parent=5 // pred_check_branch
        %145 = sbr.rel (%p142) target = $region32
      $region31: #{tpu_custom_call.1} parent=5 // pred_region
        %s146 = ssub.s32 %s12, 1
        %s147 = smul.u32 16, %s17
        %p148 = scmp.lt.s32.totalorder %s147, 63
        %s149 = scalar_select %p148, %s147, 63
        %s150 = smul.addr %s149, 4
        %s151 = scalar_lea.vmem %s0, %s150
        %p152 = pneg %p38
        %p153 = pneg %p35
        %p154 = pneg %p59
        %p155 = pneg %p56
        %p156 = pneg %p80
        %p157 = pneg %p77
        %p158 = pneg %p106
        %p159 = pneg %p103
        %s160 = sand.u32 %s93, 1
        %s161 = scalar_lea.sflag [#allocation3], %s160
        %s162 = sand.u32 %s93, 1
        %s163 = smul.addr %s162, 64
        %s164 = scalar_lea.vmem [#allocation2], %s163
        %s165 = smul.u32 16, %s17
        %p166 = scmp.lt.s32.totalorder %s165, 63
        %s167 = scalar_select %p166, %s165, 63
        %s168 = smul.addr %s167, 4
        %s169 = scalar_lea.vmem %s0, %s168
        %s170 = smul.u32 16, %s17
        %s171 = smul.u32 16, %s17
        %v173 = vld [vmem:[%s169] sm:$0xf]
        %v174 = vld [vmem:[%s169 + $0x4] sm:$0xf]
        %v175 = vld [vmem:[%s169 + $0x8] sm:$0xf]
        %v176 = vld [vmem:[%s169 + $0xc] sm:$0xf]
        %v177 = vld [vmem:[%s169 + $0x10] sm:$0xf]
        %v178 = vld [vmem:[%s169 + $0x14] sm:$0xf]
        %v179 = vld [vmem:[%s169 + $0x18] sm:$0xf]
        %v180 = vld [vmem:[%s169 + $0x1c] sm:$0xf]
        %v181 = vld [vmem:[%s169 + $0x20] sm:$0xf]
        %v182 = vld [vmem:[%s169 + $0x24] sm:$0xf]
        %v183 = vld [vmem:[%s169 + $0x28] sm:$0xf]
        %v184 = vld [vmem:[%s169 + $0x2c] sm:$0xf]
        %v185 = vld [vmem:[%s169 + $0x30] sm:$0xf]
        %v186 = vld [vmem:[%s169 + $0x34] sm:$0xf]
        %v187 = vld [vmem:[%s169 + $0x38] sm:$0xf]
        %v188 = vld [vmem:[%s169 + $0x3c] sm:$0xf]
        %v189 = vld [vmem:[%s1] sm:$0x3]
        %v190 = vld [vmem:[%s2] sm:$0x1]
        %v192 = vperm.slane %v190, 0
        %v210 = vunpack.c.l.b16 %v173
        %v211 = vunpack.c.l.b16 %v174
        %v212 = vunpack.c.l.b16 %v175
        %v213 = vunpack.c.l.b16 %v176
        %v214 = vunpack.c.l.b16 %v177
        %v215 = vunpack.c.l.b16 %v178
        %v216 = vunpack.c.l.b16 %v179
        %v217 = vunpack.c.l.b16 %v180
        %v218 = vunpack.c.l.b16 %v181
        %v219 = vunpack.c.l.b16 %v182
        %v220 = vunpack.c.l.b16 %v183
        %v221 = vunpack.c.l.b16 %v184
        %v222 = vunpack.c.l.b16 %v185
        %v223 = vunpack.c.l.b16 %v186
        %v224 = vunpack.c.l.b16 %v187
        %v225 = vunpack.c.l.b16 %v188
        %v226 = vpack.c.b16 %v211, %v210
        %v227 = vpack.c.b16 %v213, %v212
        %v228 = vpack.c.b16 %v215, %v214
        %v229 = vpack.c.b16 %v217, %v216
        %v230 = vpack.c.b16 %v219, %v218
        %v231 = vpack.c.b16 %v221, %v220
        %v232 = vpack.c.b16 %v223, %v222
        %v233 = vpack.c.b16 %v225, %v224
        %vm234 = vcmask 23552
        %v236 = vsel %vm234, %v226, 0
        %v239 = vsel %vm234, %v227, 0
        %v242 = vsel %vm234, %v228, 0
        %v245 = vsel %vm234, %v229, 0
        %v248 = vsel %vm234, %v230, 0
        %v251 = vsel %vm234, %v231, 0
        %v254 = vsel %vm234, %v232, 0
        %v257 = vsel %vm234, %v233, 0
        %vm259 = vcmask 1040384
        %vm260 = vcmask 1041408
        %v261 = vsel %vm259, 4294967295, 65535
        %v262 = vsel %vm260, %v261, 0
        %v264 = vand.u32 %v189, %v262
        %266 = vmatpush.bf16.msra.mxu0 0
        %267 = vmatpush.bf16.msra.mxu0 0
        %268 = vmatpush.bf16.msra.mxu0 0
        %269 = vmatpush.bf16.msra.mxu0 0
        %270 = vmatpush.bf16.msra.mxu0 0
        %271 = vmatpush.bf16.msra.mxu0 0
        %272 = vmatpush.bf16.msra.mxu0 0
        %273 = vmatpush.bf16.msra.mxu0 %v264
        %274 = vmatmul.bf16.gmra.mxu0 %v236
        %v275 = vpop.f32.mrf.mxu0
        %v276 = vadd.f32 %v192, %v275
        %v277 = vpop.f32.mrf.mxu0
        %v278 = vadd.f32 %v192, %v277
        %279 = vmatmul.bf16.gmra.mxu0 %v239
        %v280 = vpop.f32.mrf.mxu0
        %v281 = vadd.f32 %v192, %v280
        %v282 = vpop.f32.mrf.mxu0
        %v283 = vadd.f32 %v192, %v282
        %284 = vmatmul.bf16.gmra.mxu0 %v242
        %v285 = vpop.f32.mrf.mxu0
        %v286 = vadd.f32 %v192, %v285
        %v287 = vpop.f32.mrf.mxu0
        %v288 = vadd.f32 %v192, %v287
        %289 = vmatmul.bf16.gmra.mxu0 %v245
        %v290 = vpop.f32.mrf.mxu0
        %v291 = vadd.f32 %v192, %v290
        %v292 = vpop.f32.mrf.mxu0
        %v293 = vadd.f32 %v192, %v292
        %294 = vmatmul.bf16.gmra.mxu0 %v248
        %v295 = vpop.f32.mrf.mxu0
        %v296 = vadd.f32 %v192, %v295
        %v297 = vpop.f32.mrf.mxu0
        %v298 = vadd.f32 %v192, %v297
        %299 = vmatmul.bf16.gmra.mxu0 %v251
        %v300 = vpop.f32.mrf.mxu0
        %v301 = vadd.f32 %v192, %v300
        %v302 = vpop.f32.mrf.mxu0
        %v303 = vadd.f32 %v192, %v302
        %304 = vmatmul.bf16.gmra.mxu0 %v254
        %v305 = vpop.f32.mrf.mxu0
        %v306 = vadd.f32 %v192, %v305
        %v307 = vpop.f32.mrf.mxu0
        %v308 = vadd.f32 %v192, %v307
        %309 = vmatmul.bf16.gmra.mxu0 %v257
        %v310 = vpop.f32.mrf.mxu0
        %v311 = vadd.f32 %v192, %v310
        %v312 = vpop.f32.mrf.mxu0
        %v313 = vadd.f32 %v192, %v312
        %314 = vdwg.mxu0
        %v315 = vand.u32 2147483647, %v276
        %vm316 = vcmp.le.f32.partialorder %v315, 0.7853982
        %vm317 = vcmp.lt.s32.totalorder %v276, 0
        %v318 = vand.u32 %v276, 2139095040
        %v319 = vshrl.u32 %v318, 23
        %v320 = vsub.s32 %v319, 127
        %v321 = vand.u32 2147483647, %v276
        %v322 = vand.u32 %v321, 8388607
        %v323 = vor.u32 %v322, 8388608
        %v324 = vsub.s32 0, %v323
        %v325 = vadd.s32 %v320, 1
        %vm326 = vcmp.gt.s32.totalorder %v325, 0
        %v327 = vsel %vm326, %v325, 0
        %v328 = vshrl.u32 %v327, 5
        %v329 = vand.u32 %v327, 31
        %v330 = vsub.s32 32, %v329
        %v331 = vshrl.u32 683565275, %v330
        %v332 = vshll.u32 683565275, %v329
        %v333 = vshrl.u32 2475754826, %v330
        %v334 = vor.u32 %v332, %v333
        %v335 = vshll.u32 2475754826, %v329
        %v336 = vshrl.u32 2131351028, %v330
        %v337 = vor.u32 %v335, %v336
        %v338 = vshll.u32 2131351028, %v329
        %v339 = vshrl.u32 2102212464, %v330
        %v340 = vor.u32 %v338, %v339
        %v341 = vshll.u32 2102212464, %v329
        %v342 = vshrl.u32 920167782, %v330
        %v343 = vor.u32 %v341, %v342
        %v344 = vshll.u32 920167782, %v329
        %v345 = vshrl.u32 1326507024, %v330
        %v346 = vor.u32 %v344, %v345
        %vm347 = vcmp.lt.s32.totalorder %v328, 1
        %vm348 = vcmp.lt.s32.totalorder %v328, 2
        %vm349 = vcmp.lt.s32.totalorder %v328, 3
        %vm350 = vcmp.lt.s32.totalorder %v328, 4
        %v351 = vsel %vm347, %v331, %v334
        %v352 = vsel %vm350, %v340, 2102212464
        %v353 = vsel %vm349, %v337, %v352
        %v354 = vsel %vm348, %v351, %v353
        %v355 = vsel %vm347, %v334, %v337
        %v356 = vsel %vm350, %v343, 920167782
        %v357 = vsel %vm349, %v340, %v356
        %v358 = vsel %vm348, %v355, %v357
        %v359 = vsel %vm347, %v337, %v340
        %v360 = vsel %vm350, %v346, 1326507024
        %v361 = vsel %vm349, %v343, %v360
        %v362 = vsel %vm348, %v359, %v361
        %v363 = vshll.u32 %v323, 8
        %v364 = vand.u32 %v363, 65535
        %v365 = vshrl.u32 %v363, 16
        %v366 = vand.u32 %v362, 65535
        %v367 = vshrl.u32 %v362, 16
        %v368 = vmul.u32 %v364, %v366
        %v369 = vmul.u32 %v364, %v367
        %v370 = vmul.u32 %v365, %v366
        %v371 = vmul.u32 %v365, %v367
        %v372 = vshll.u32 %v369, 16
        %v373 = vshrl.u32 %v369, 16
        %v374 = vshll.u32 %v370, 16
        %v375 = vshrl.u32 %v370, 16
        %vm376 = vc.u32 %v368, %v372
        %v377 = vsel %vm376, 1, 0
        %v378 = vadd.s32 %v368, %v372
        %v379 = vadd.s32 %v371, %v377
        %vm380 = vc.u32 %v378, %v374
        %v381 = vsel %vm380, 1, 0
        %v382 = vadd.s32 %v378, %v374
        %v383 = vadd.s32 %v379, %v381
        %v384 = vadd.s32 %v383, %v373
        %v385 = vadd.s32 %v384, %v375
        %v386 = vand.u32 %v363, 65535
        %v387 = vshrl.u32 %v363, 16
        %v388 = vand.u32 %v358, 65535
        %v389 = vshrl.u32 %v358, 16
        %v390 = vmul.u32 %v386, %v388
        %v391 = vmul.u32 %v386, %v389
        %v392 = vmul.u32 %v387, %v388
        %v393 = vmul.u32 %v387, %v389
        %v394 = vshll.u32 %v391, 16
        %v395 = vshrl.u32 %v391, 16
        %v396 = vshll.u32 %v392, 16
        %v397 = vshrl.u32 %v392, 16
        %vm398 = vc.u32 %v390, %v394
        %v399 = vsel %vm398, 1, 0
        %v400 = vadd.s32 %v390, %v394
        %v401 = vadd.s32 %v393, %v399
        %vm402 = vc.u32 %v400, %v396
        %v403 = vsel %vm402, 1, 0
        %v404 = vadd.s32 %v400, %v396
        %v405 = vadd.s32 %v401, %v403
        %v406 = vadd.s32 %v405, %v395
        %v407 = vadd.s32 %v406, %v397
        %v408 = vmul.u32 %v363, %v354
        %v409 = vadd.s32 %v385, %v404
        %vm410 = vc.u32 %v385, %v404
        %v411 = vadd.s32 %v407, 1
        %v412 = vsel %vm410, %v411, %v407
        %v413 = vadd.s32 %v408, %v412
        %v414 = vadd.s32 %v413, 536870912
        %v415 = vshrl.u32 %v414, 30
        %v416 = vshll.u32 %v415, 30
        %v417 = vsub.s32 %v413, %v416
        %vm418 = vcmp.lt.s32.totalorder %v417, 0
        %v419 = vsub.s32 0, %v417
        %v420 = vsel %vm418, %v419, %v417
        %v421 = vclz %v420
        %v422 = vsub.s32 %v421, 2
        %vm423 = vcmp.gt.s32.totalorder 0, %v422
        %v424 = vsel %vm423, 0, %v422
        %v425 = vsub.s32 32, %v424
        %v426 = vshll.u32 %v417, %v424
        %v427 = vshrl.u32 %v409, %v425
        %v428 = vor.u32 %v426, %v427
        %v429 = vsub.s32 4294967266, %v424
        %v430 = vadd.s32 %v429, 127
        %v431 = vshll.u32 %v430, 23
        %v432 = vor.u32 4788187, %v431
        %v433 = vand.u32 2147483647, %v432
        %v435 = vcvt.s32.f32 %v428
        %v436 = vmul.f32 %v435, %v433
        %v437 = vxor.u32 %v436, 2147483648
        %v438 = vsel %vm317, %v437, %v436
        %v439 = vsub.s32 4, %v415
        %v440 = vsel %vm317, %v439, %v415
        %v441 = vsel %vm316, %v276, %v438
        %v442 = vsel %vm316, 0, %v440
        %v443 = vmul.f32 %v441, %v441
        %v444 = vmul.f32 %v443, -0.001358992
        %v445 = vadd.f32 %v444, 0.041655596
        %v446 = vmul.f32 %v443, %v445
        %v447 = vadd.f32 %v446, -0.4999988
        %v448 = vmul.f32 %v443, %v447
        %v449 = vadd.f32 1.0, %v448
        %v450 = vmul.f32 %v441, %v441
        %v451 = vmul.f32 %v450, -0.00019511016
        %v452 = vadd.f32 %v451, 0.008332121
        %v453 = vmul.f32 %v450, %v452
        %v454 = vadd.f32 %v453, -0.16666654
        %v455 = vmul.f32 %v450, %v454
        %v456 = vadd.f32 %v455, 1.0
        %v457 = vmul.f32 %v456, %v441
        %vm458 = vweird.f32 %v276
        %v459 = vadd.s32 %v442, 3
        %v460 = vand.u32 %v459, 3
        %vm461 = vcmp.lt.s32.totalorder %v460, 2
        %vm462 = vcmp.eq.s32.totalorder %v460, 0
        %v463 = vxor.u32 %v457, 2147483648
        %v464 = vsel %vm462, %v449, %v463
        %vm465 = vcmp.eq.s32.totalorder %v460, 2
        %v466 = vxor.u32 %v449, 2147483648
        %v467 = vsel %vm465, %v466, %v457
        %v468 = vsel %vm461, %v464, %v467
        %v469 = vsel %vm458, nan, %v468
        %v470 = vand.u32 2147483647, %v278
        %vm471 = vcmp.le.f32.partialorder %v470, 0.7853982
        %vm472 = vcmp.lt.s32.totalorder %v278, 0
        %v473 = vand.u32 %v278, 2139095040
        %v474 = vshrl.u32 %v473, 23
        %v475 = vsub.s32 %v474, 127
        %v476 = vand.u32 2147483647, %v278
        %v477 = vand.u32 %v476, 8388607
        %v478 = vor.u32 %v477, 8388608
        %v479 = vsub.s32 0, %v478
        %v480 = vadd.s32 %v475, 1
        %vm481 = vcmp.gt.s32.totalorder %v480, 0
        %v482 = vsel %vm481, %v480, 0
        %v483 = vshrl.u32 %v482, 5
        %v484 = vand.u32 %v482, 31
        %v485 = vsub.s32 32, %v484
        %v486 = vshrl.u32 683565275, %v485
        %v487 = vshll.u32 683565275, %v484
        %v488 = vshrl.u32 2475754826, %v485
        %v489 = vor.u32 %v487, %v488
        %v490 = vshll.u32 2475754826, %v484
        %v491 = vshrl.u32 2131351028, %v485
        %v492 = vor.u32 %v490, %v491
        %v493 = vshll.u32 2131351028, %v484
        %v494 = vshrl.u32 2102212464, %v485
        %v495 = vor.u32 %v493, %v494
        %v496 = vshll.u32 2102212464, %v484
        %v497 = vshrl.u32 920167782, %v485
        %v498 = vor.u32 %v496, %v497
        %v499 = vshll.u32 920167782, %v484
        %v500 = vshrl.u32 1326507024, %v485
        %v501 = vor.u32 %v499, %v500
        %vm502 = vcmp.lt.s32.totalorder %v483, 1
        %vm503 = vcmp.lt.s32.totalorder %v483, 2
        %vm504 = vcmp.lt.s32.totalorder %v483, 3
        %vm505 = vcmp.lt.s32.totalorder %v483, 4
        %v506 = vsel %vm502, %v486, %v489
        %v507 = vsel %vm505, %v495, 2102212464
        %v508 = vsel %vm504, %v492, %v507
        %v509 = vsel %vm503, %v506, %v508
        %v510 = vsel %vm502, %v489, %v492
        %v511 = vsel %vm505, %v498, 920167782
        %v512 = vsel %vm504, %v495, %v511
        %v513 = vsel %vm503, %v510, %v512
        %v514 = vsel %vm502, %v492, %v495
        %v515 = vsel %vm505, %v501, 1326507024
        %v516 = vsel %vm504, %v498, %v515
        %v517 = vsel %vm503, %v514, %v516
        %v518 = vshll.u32 %v478, 8
        %v519 = vand.u32 %v518, 65535
        %v520 = vshrl.u32 %v518, 16
        %v521 = vand.u32 %v517, 65535
        %v522 = vshrl.u32 %v517, 16
        %v523 = vmul.u32 %v519, %v521
        %v524 = vmul.u32 %v519, %v522
        %v525 = vmul.u32 %v520, %v521
        %v526 = vmul.u32 %v520, %v522
        %v527 = vshll.u32 %v524, 16
        %v528 = vshrl.u32 %v524, 16
        %v529 = vshll.u32 %v525, 16
        %v530 = vshrl.u32 %v525, 16
        %vm531 = vc.u32 %v523, %v527
        %v532 = vsel %vm531, 1, 0
        %v533 = vadd.s32 %v523, %v527
        %v534 = vadd.s32 %v526, %v532
        %vm535 = vc.u32 %v533, %v529
        %v536 = vsel %vm535, 1, 0
        %v537 = vadd.s32 %v533, %v529
        %v538 = vadd.s32 %v534, %v536
        %v539 = vadd.s32 %v538, %v528
        %v540 = vadd.s32 %v539, %v530
        %v541 = vand.u32 %v518, 65535
        %v542 = vshrl.u32 %v518, 16
        %v543 = vand.u32 %v513, 65535
        %v544 = vshrl.u32 %v513, 16
        %v545 = vmul.u32 %v541, %v543
        %v546 = vmul.u32 %v541, %v544
        %v547 = vmul.u32 %v542, %v543
        %v548 = vmul.u32 %v542, %v544
        %v549 = vshll.u32 %v546, 16
        %v550 = vshrl.u32 %v546, 16
        %v551 = vshll.u32 %v547, 16
        %v552 = vshrl.u32 %v547, 16
        %vm553 = vc.u32 %v545, %v549
        %v554 = vsel %vm553, 1, 0
        %v555 = vadd.s32 %v545, %v549
        %v556 = vadd.s32 %v548, %v554
        %vm557 = vc.u32 %v555, %v551
        %v558 = vsel %vm557, 1, 0
        %v559 = vadd.s32 %v555, %v551
        %v560 = vadd.s32 %v556, %v558
        %v561 = vadd.s32 %v560, %v550
        %v562 = vadd.s32 %v561, %v552
        %v563 = vmul.u32 %v518, %v509
        %v564 = vadd.s32 %v540, %v559
        %vm565 = vc.u32 %v540, %v559
        %v566 = vadd.s32 %v562, 1
        %v567 = vsel %vm565, %v566, %v562
        %v568 = vadd.s32 %v563, %v567
        %v569 = vadd.s32 %v568, 536870912
        %v570 = vshrl.u32 %v569, 30
        %v571 = vshll.u32 %v570, 30
        %v572 = vsub.s32 %v568, %v571
        %vm573 = vcmp.lt.s32.totalorder %v572, 0
        %v574 = vsub.s32 0, %v572
        %v575 = vsel %vm573, %v574, %v572
        %v576 = vclz %v575
        %v577 = vsub.s32 %v576, 2
        %vm578 = vcmp.gt.s32.totalorder 0, %v577
        %v579 = vsel %vm578, 0, %v577
        %v580 = vsub.s32 32, %v579
        %v581 = vshll.u32 %v572, %v579
        %v582 = vshrl.u32 %v564, %v580
        %v583 = vor.u32 %v581, %v582
        %v584 = vsub.s32 4294967266, %v579
        %v585 = vadd.s32 %v584, 127
        %v586 = vshll.u32 %v585, 23
        %v587 = vor.u32 4788187, %v586
        %v588 = vand.u32 2147483647, %v587
        %v590 = vcvt.s32.f32 %v583
        %v591 = vmul.f32 %v590, %v588
        %v592 = vxor.u32 %v591, 2147483648
        %v593 = vsel %vm472, %v592, %v591
        %v594 = vsub.s32 4, %v570
        %v595 = vsel %vm472, %v594, %v570
        %v596 = vsel %vm471, %v278, %v593
        %v597 = vsel %vm471, 0, %v595
        %v598 = vmul.f32 %v596, %v596
        %v599 = vmul.f32 %v598, -0.001358992
        %v600 = vadd.f32 %v599, 0.041655596
        %v601 = vmul.f32 %v598, %v600
        %v602 = vadd.f32 %v601, -0.4999988
        %v603 = vmul.f32 %v598, %v602
        %v604 = vadd.f32 1.0, %v603
        %v605 = vmul.f32 %v596, %v596
        %v606 = vmul.f32 %v605, -0.00019511016
        %v607 = vadd.f32 %v606, 0.008332121
        %v608 = vmul.f32 %v605, %v607
        %v609 = vadd.f32 %v608, -0.16666654
        %v610 = vmul.f32 %v605, %v609
        %v611 = vadd.f32 %v610, 1.0
        %v612 = vmul.f32 %v611, %v596
        %vm613 = vweird.f32 %v278
        %v614 = vadd.s32 %v597, 3
        %v615 = vand.u32 %v614, 3
        %vm616 = vcmp.lt.s32.totalorder %v615, 2
        %vm617 = vcmp.eq.s32.totalorder %v615, 0
        %v618 = vxor.u32 %v612, 2147483648
        %v619 = vsel %vm617, %v604, %v618
        %vm620 = vcmp.eq.s32.totalorder %v615, 2
        %v621 = vxor.u32 %v604, 2147483648
        %v622 = vsel %vm620, %v621, %v612
        %v623 = vsel %vm616, %v619, %v622
        %v624 = vsel %vm613, nan, %v623
        %v625 = vand.u32 2147483647, %v281
        %vm626 = vcmp.le.f32.partialorder %v625, 0.7853982
        %vm627 = vcmp.lt.s32.totalorder %v281, 0
        %v628 = vand.u32 %v281, 2139095040
        %v629 = vshrl.u32 %v628, 23
        %v630 = vsub.s32 %v629, 127
        %v631 = vand.u32 2147483647, %v281
        %v632 = vand.u32 %v631, 8388607
        %v633 = vor.u32 %v632, 8388608
        %v634 = vsub.s32 0, %v633
        %v635 = vadd.s32 %v630, 1
        %vm636 = vcmp.gt.s32.totalorder %v635, 0
        %v637 = vsel %vm636, %v635, 0
        %v638 = vshrl.u32 %v637, 5
        %v639 = vand.u32 %v637, 31
        %v640 = vsub.s32 32, %v639
        %v641 = vshrl.u32 683565275, %v640
        %v642 = vshll.u32 683565275, %v639
        %v643 = vshrl.u32 2475754826, %v640
        %v644 = vor.u32 %v642, %v643
        %v645 = vshll.u32 2475754826, %v639
        %v646 = vshrl.u32 2131351028, %v640
        %v647 = vor.u32 %v645, %v646
        %v648 = vshll.u32 2131351028, %v639
        %v649 = vshrl.u32 2102212464, %v640
        %v650 = vor.u32 %v648, %v649
        %v651 = vshll.u32 2102212464, %v639
        %v652 = vshrl.u32 920167782, %v640
        %v653 = vor.u32 %v651, %v652
        %v654 = vshll.u32 920167782, %v639
        %v655 = vshrl.u32 1326507024, %v640
        %v656 = vor.u32 %v654, %v655
        %vm657 = vcmp.lt.s32.totalorder %v638, 1
        %vm658 = vcmp.lt.s32.totalorder %v638, 2
        %vm659 = vcmp.lt.s32.totalorder %v638, 3
        %vm660 = vcmp.lt.s32.totalorder %v638, 4
        %v661 = vsel %vm657, %v641, %v644
        %v662 = vsel %vm660, %v650, 2102212464
        %v663 = vsel %vm659, %v647, %v662
        %v664 = vsel %vm658, %v661, %v663
        %v665 = vsel %vm657, %v644, %v647
        %v666 = vsel %vm660, %v653, 920167782
        %v667 = vsel %vm659, %v650, %v666
        %v668 = vsel %vm658, %v665, %v667
        %v669 = vsel %vm657, %v647, %v650
        %v670 = vsel %vm660, %v656, 1326507024
        %v671 = vsel %vm659, %v653, %v670
        %v672 = vsel %vm658, %v669, %v671
        %v673 = vshll.u32 %v633, 8
        %v674 = vand.u32 %v673, 65535
        %v675 = vshrl.u32 %v673, 16
        %v676 = vand.u32 %v672, 65535
        %v677 = vshrl.u32 %v672, 16
        %v678 = vmul.u32 %v674, %v676
        %v679 = vmul.u32 %v674, %v677
        %v680 = vmul.u32 %v675, %v676
        %v681 = vmul.u32 %v675, %v677
        %v682 = vshll.u32 %v679, 16
        %v683 = vshrl.u32 %v679, 16
        %v684 = vshll.u32 %v680, 16
        %v685 = vshrl.u32 %v680, 16
        %vm686 = vc.u32 %v678, %v682
        %v687 = vsel %vm686, 1, 0
        %v688 = vadd.s32 %v678, %v682
        %v689 = vadd.s32 %v681, %v687
        %vm690 = vc.u32 %v688, %v684
        %v691 = vsel %vm690, 1, 0
        %v692 = vadd.s32 %v688, %v684
        %v693 = vadd.s32 %v689, %v691
        %v694 = vadd.s32 %v693, %v683
        %v695 = vadd.s32 %v694, %v685
        %v696 = vand.u32 %v673, 65535
        %v697 = vshrl.u32 %v673, 16
        %v698 = vand.u32 %v668, 65535
        %v699 = vshrl.u32 %v668, 16
        %v700 = vmul.u32 %v696, %v698
        %v701 = vmul.u32 %v696, %v699
        %v702 = vmul.u32 %v697, %v698
        %v703 = vmul.u32 %v697, %v699
        %v704 = vshll.u32 %v701, 16
        %v705 = vshrl.u32 %v701, 16
        %v706 = vshll.u32 %v702, 16
        %v707 = vshrl.u32 %v702, 16
        %vm708 = vc.u32 %v700, %v704
        %v709 = vsel %vm708, 1, 0
        %v710 = vadd.s32 %v700, %v704
        %v711 = vadd.s32 %v703, %v709
        %vm712 = vc.u32 %v710, %v706
        %v713 = vsel %vm712, 1, 0
        %v714 = vadd.s32 %v710, %v706
        %v715 = vadd.s32 %v711, %v713
        %v716 = vadd.s32 %v715, %v705
        %v717 = vadd.s32 %v716, %v707
        %v718 = vmul.u32 %v673, %v664
        %v719 = vadd.s32 %v695, %v714
        %vm720 = vc.u32 %v695, %v714
        %v721 = vadd.s32 %v717, 1
        %v722 = vsel %vm720, %v721, %v717
        %v723 = vadd.s32 %v718, %v722
        %v724 = vadd.s32 %v723, 536870912
        %v725 = vshrl.u32 %v724, 30
        %v726 = vshll.u32 %v725, 30
        %v727 = vsub.s32 %v723, %v726
        %vm728 = vcmp.lt.s32.totalorder %v727, 0
        %v729 = vsub.s32 0, %v727
        %v730 = vsel %vm728, %v729, %v727
        %v731 = vclz %v730
        %v732 = vsub.s32 %v731, 2
        %vm733 = vcmp.gt.s32.totalorder 0, %v732
        %v734 = vsel %vm733, 0, %v732
        %v735 = vsub.s32 32, %v734
        %v736 = vshll.u32 %v727, %v734
        %v737 = vshrl.u32 %v719, %v735
        %v738 = vor.u32 %v736, %v737
        %v739 = vsub.s32 4294967266, %v734
        %v740 = vadd.s32 %v739, 127
        %v741 = vshll.u32 %v740, 23
        %v742 = vor.u32 4788187, %v741
        %v743 = vand.u32 2147483647, %v742
        %v745 = vcvt.s32.f32 %v738
        %v746 = vmul.f32 %v745, %v743
        %v747 = vxor.u32 %v746, 2147483648
        %v748 = vsel %vm627, %v747, %v746
        %v749 = vsub.s32 4, %v725
        %v750 = vsel %vm627, %v749, %v725
        %v751 = vsel %vm626, %v281, %v748
        %v752 = vsel %vm626, 0, %v750
        %v753 = vmul.f32 %v751, %v751
        %v754 = vmul.f32 %v753, -0.001358992
        %v755 = vadd.f32 %v754, 0.041655596
        %v756 = vmul.f32 %v753, %v755
        %v757 = vadd.f32 %v756, -0.4999988
        %v758 = vmul.f32 %v753, %v757
        %v759 = vadd.f32 1.0, %v758
        %v760 = vmul.f32 %v751, %v751
        %v761 = vmul.f32 %v760, -0.00019511016
        %v762 = vadd.f32 %v761, 0.008332121
        %v763 = vmul.f32 %v760, %v762
        %v764 = vadd.f32 %v763, -0.16666654
        %v765 = vmul.f32 %v760, %v764
        %v766 = vadd.f32 %v765, 1.0
        %v767 = vmul.f32 %v766, %v751
        %vm768 = vweird.f32 %v281
        %v769 = vadd.s32 %v752, 3
        %v770 = vand.u32 %v769, 3
        %vm771 = vcmp.lt.s32.totalorder %v770, 2
        %vm772 = vcmp.eq.s32.totalorder %v770, 0
        %v773 = vxor.u32 %v767, 2147483648
        %v774 = vsel %vm772, %v759, %v773
        %vm775 = vcmp.eq.s32.totalorder %v770, 2
        %v776 = vxor.u32 %v759, 2147483648
        %v777 = vsel %vm775, %v776, %v767
        %v778 = vsel %vm771, %v774, %v777
        %v779 = vsel %vm768, nan, %v778
        %v780 = vand.u32 2147483647, %v283
        %vm781 = vcmp.le.f32.partialorder %v780, 0.7853982
        %vm782 = vcmp.lt.s32.totalorder %v283, 0
        %v783 = vand.u32 %v283, 2139095040
        %v784 = vshrl.u32 %v783, 23
        %v785 = vsub.s32 %v784, 127
        %v786 = vand.u32 2147483647, %v283
        %v787 = vand.u32 %v786, 8388607
        %v788 = vor.u32 %v787, 8388608
        %v789 = vsub.s32 0, %v788
        %v790 = vadd.s32 %v785, 1
        %vm791 = vcmp.gt.s32.totalorder %v790, 0
        %v792 = vsel %vm791, %v790, 0
        %v793 = vshrl.u32 %v792, 5
        %v794 = vand.u32 %v792, 31
        %v795 = vsub.s32 32, %v794
        %v796 = vshrl.u32 683565275, %v795
        %v797 = vshll.u32 683565275, %v794
        %v798 = vshrl.u32 2475754826, %v795
        %v799 = vor.u32 %v797, %v798
        %v800 = vshll.u32 2475754826, %v794
        %v801 = vshrl.u32 2131351028, %v795
        %v802 = vor.u32 %v800, %v801
        %v803 = vshll.u32 2131351028, %v794
        %v804 = vshrl.u32 2102212464, %v795
        %v805 = vor.u32 %v803, %v804
        %v806 = vshll.u32 2102212464, %v794
        %v807 = vshrl.u32 920167782, %v795
        %v808 = vor.u32 %v806, %v807
        %v809 = vshll.u32 920167782, %v794
        %v810 = vshrl.u32 1326507024, %v795
        %v811 = vor.u32 %v809, %v810
        %vm812 = vcmp.lt.s32.totalorder %v793, 1
        %vm813 = vcmp.lt.s32.totalorder %v793, 2
        %vm814 = vcmp.lt.s32.totalorder %v793, 3
        %vm815 = vcmp.lt.s32.totalorder %v793, 4
        %v816 = vsel %vm812, %v796, %v799
        %v817 = vsel %vm815, %v805, 2102212464
        %v818 = vsel %vm814, %v802, %v817
        %v819 = vsel %vm813, %v816, %v818
        %v820 = vsel %vm812, %v799, %v802
        %v821 = vsel %vm815, %v808, 920167782
        %v822 = vsel %vm814, %v805, %v821
        %v823 = vsel %vm813, %v820, %v822
        %v824 = vsel %vm812, %v802, %v805
        %v825 = vsel %vm815, %v811, 1326507024
        %v826 = vsel %vm814, %v808, %v825
        %v827 = vsel %vm813, %v824, %v826
        %v828 = vshll.u32 %v788, 8
        %v829 = vand.u32 %v828, 65535
        %v830 = vshrl.u32 %v828, 16
        %v831 = vand.u32 %v827, 65535
        %v832 = vshrl.u32 %v827, 16
        %v833 = vmul.u32 %v829, %v831
        %v834 = vmul.u32 %v829, %v832
        %v835 = vmul.u32 %v830, %v831
        %v836 = vmul.u32 %v830, %v832
        %v837 = vshll.u32 %v834, 16
        %v838 = vshrl.u32 %v834, 16
        %v839 = vshll.u32 %v835, 16
        %v840 = vshrl.u32 %v835, 16
        %vm841 = vc.u32 %v833, %v837
        %v842 = vsel %vm841, 1, 0
        %v843 = vadd.s32 %v833, %v837
        %v844 = vadd.s32 %v836, %v842
        %vm845 = vc.u32 %v843, %v839
        %v846 = vsel %vm845, 1, 0
        %v847 = vadd.s32 %v843, %v839
        %v848 = vadd.s32 %v844, %v846
        %v849 = vadd.s32 %v848, %v838
        %v850 = vadd.s32 %v849, %v840
        %v851 = vand.u32 %v828, 65535
        %v852 = vshrl.u32 %v828, 16
        %v853 = vand.u32 %v823, 65535
        %v854 = vshrl.u32 %v823, 16
        %v855 = vmul.u32 %v851, %v853
        %v856 = vmul.u32 %v851, %v854
        %v857 = vmul.u32 %v852, %v853
        %v858 = vmul.u32 %v852, %v854
        %v859 = vshll.u32 %v856, 16
        %v860 = vshrl.u32 %v856, 16
        %v861 = vshll.u32 %v857, 16
        %v862 = vshrl.u32 %v857, 16
        %vm863 = vc.u32 %v855, %v859
        %v864 = vsel %vm863, 1, 0
        %v865 = vadd.s32 %v855, %v859
        %v866 = vadd.s32 %v858, %v864
        %vm867 = vc.u32 %v865, %v861
        %v868 = vsel %vm867, 1, 0
        %v869 = vadd.s32 %v865, %v861
        %v870 = vadd.s32 %v866, %v868
        %v871 = vadd.s32 %v870, %v860
        %v872 = vadd.s32 %v871, %v862
        %v873 = vmul.u32 %v828, %v819
        %v874 = vadd.s32 %v850, %v869
        %vm875 = vc.u32 %v850, %v869
        %v876 = vadd.s32 %v872, 1
        %v877 = vsel %vm875, %v876, %v872
        %v878 = vadd.s32 %v873, %v877
        %v879 = vadd.s32 %v878, 536870912
        %v880 = vshrl.u32 %v879, 30
        %v881 = vshll.u32 %v880, 30
        %v882 = vsub.s32 %v878, %v881
        %vm883 = vcmp.lt.s32.totalorder %v882, 0
        %v884 = vsub.s32 0, %v882
        %v885 = vsel %vm883, %v884, %v882
        %v886 = vclz %v885
        %v887 = vsub.s32 %v886, 2
        %vm888 = vcmp.gt.s32.totalorder 0, %v887
        %v889 = vsel %vm888, 0, %v887
        %v890 = vsub.s32 32, %v889
        %v891 = vshll.u32 %v882, %v889
        %v892 = vshrl.u32 %v874, %v890
        %v893 = vor.u32 %v891, %v892
        %v894 = vsub.s32 4294967266, %v889
        %v895 = vadd.s32 %v894, 127
        %v896 = vshll.u32 %v895, 23
        %v897 = vor.u32 4788187, %v896
        %v898 = vand.u32 2147483647, %v897
        %v900 = vcvt.s32.f32 %v893
        %v901 = vmul.f32 %v900, %v898
        %v902 = vxor.u32 %v901, 2147483648
        %v903 = vsel %vm782, %v902, %v901
        %v904 = vsub.s32 4, %v880
        %v905 = vsel %vm782, %v904, %v880
        %v906 = vsel %vm781, %v283, %v903
        %v907 = vsel %vm781, 0, %v905
        %v908 = vmul.f32 %v906, %v906
        %v909 = vmul.f32 %v908, -0.001358992
        %v910 = vadd.f32 %v909, 0.041655596
        %v911 = vmul.f32 %v908, %v910
        %v912 = vadd.f32 %v911, -0.4999988
        %v913 = vmul.f32 %v908, %v912
        %v914 = vadd.f32 1.0, %v913
        %v915 = vmul.f32 %v906, %v906
        %v916 = vmul.f32 %v915, -0.00019511016
        %v917 = vadd.f32 %v916, 0.008332121
        %v918 = vmul.f32 %v915, %v917
        %v919 = vadd.f32 %v918, -0.16666654
        %v920 = vmul.f32 %v915, %v919
        %v921 = vadd.f32 %v920, 1.0
        %v922 = vmul.f32 %v921, %v906
        %vm923 = vweird.f32 %v283
        %v924 = vadd.s32 %v907, 3
        %v925 = vand.u32 %v924, 3
        %vm926 = vcmp.lt.s32.totalorder %v925, 2
        %vm927 = vcmp.eq.s32.totalorder %v925, 0
        %v928 = vxor.u32 %v922, 2147483648
        %v929 = vsel %vm927, %v914, %v928
        %vm930 = vcmp.eq.s32.totalorder %v925, 2
        %v931 = vxor.u32 %v914, 2147483648
        %v932 = vsel %vm930, %v931, %v922
        %v933 = vsel %vm926, %v929, %v932
        %v934 = vsel %vm923, nan, %v933
        %v935 = vand.u32 2147483647, %v286
        %vm936 = vcmp.le.f32.partialorder %v935, 0.7853982
        %vm937 = vcmp.lt.s32.totalorder %v286, 0
        %v938 = vand.u32 %v286, 2139095040
        %v939 = vshrl.u32 %v938, 23
        %v940 = vsub.s32 %v939, 127
        %v941 = vand.u32 2147483647, %v286
        %v942 = vand.u32 %v941, 8388607
        %v943 = vor.u32 %v942, 8388608
        %v944 = vsub.s32 0, %v943
        %v945 = vadd.s32 %v940, 1
        %vm946 = vcmp.gt.s32.totalorder %v945, 0
        %v947 = vsel %vm946, %v945, 0
        %v948 = vshrl.u32 %v947, 5
        %v949 = vand.u32 %v947, 31
        %v950 = vsub.s32 32, %v949
        %v951 = vshrl.u32 683565275, %v950
        %v952 = vshll.u32 683565275, %v949
        %v953 = vshrl.u32 2475754826, %v950
        %v954 = vor.u32 %v952, %v953
        %v955 = vshll.u32 2475754826, %v949
        %v956 = vshrl.u32 2131351028, %v950
        %v957 = vor.u32 %v955, %v956
        %v958 = vshll.u32 2131351028, %v949
        %v959 = vshrl.u32 2102212464, %v950
        %v960 = vor.u32 %v958, %v959
        %v961 = vshll.u32 2102212464, %v949
        %v962 = vshrl.u32 920167782, %v950
        %v963 = vor.u32 %v961, %v962
        %v964 = vshll.u32 920167782, %v949
        %v965 = vshrl.u32 1326507024, %v950
        %v966 = vor.u32 %v964, %v965
        %vm967 = vcmp.lt.s32.totalorder %v948, 1
        %vm968 = vcmp.lt.s32.totalorder %v948, 2
        %vm969 = vcmp.lt.s32.totalorder %v948, 3
        %vm970 = vcmp.lt.s32.totalorder %v948, 4
        %v971 = vsel %vm967, %v951, %v954
        %v972 = vsel %vm970, %v960, 2102212464
        %v973 = vsel %vm969, %v957, %v972
        %v974 = vsel %vm968, %v971, %v973
        %v975 = vsel %vm967, %v954, %v957
        %v976 = vsel %vm970, %v963, 920167782
        %v977 = vsel %vm969, %v960, %v976
        %v978 = vsel %vm968, %v975, %v977
        %v979 = vsel %vm967, %v957, %v960
        %v980 = vsel %vm970, %v966, 1326507024
        %v981 = vsel %vm969, %v963, %v980
        %v982 = vsel %vm968, %v979, %v981
        %v983 = vshll.u32 %v943, 8
        %v984 = vand.u32 %v983, 65535
        %v985 = vshrl.u32 %v983, 16
        %v986 = vand.u32 %v982, 65535
        %v987 = vshrl.u32 %v982, 16
        %v988 = vmul.u32 %v984, %v986
        %v989 = vmul.u32 %v984, %v987
        %v990 = vmul.u32 %v985, %v986
        %v991 = vmul.u32 %v985, %v987
        %v992 = vshll.u32 %v989, 16
        %v993 = vshrl.u32 %v989, 16
        %v994 = vshll.u32 %v990, 16
        %v995 = vshrl.u32 %v990, 16
        %vm996 = vc.u32 %v988, %v992
        %v997 = vsel %vm996, 1, 0
        %v998 = vadd.s32 %v988, %v992
        %v999 = vadd.s32 %v991, %v997
        %vm1000 = vc.u32 %v998, %v994
        %v1001 = vsel %vm1000, 1, 0
        %v1002 = vadd.s32 %v998, %v994
        %v1003 = vadd.s32 %v999, %v1001
        %v1004 = vadd.s32 %v1003, %v993
        %v1005 = vadd.s32 %v1004, %v995
        %v1006 = vand.u32 %v983, 65535
        %v1007 = vshrl.u32 %v983, 16
        %v1008 = vand.u32 %v978, 65535
        %v1009 = vshrl.u32 %v978, 16
        %v1010 = vmul.u32 %v1006, %v1008
        %v1011 = vmul.u32 %v1006, %v1009
        %v1012 = vmul.u32 %v1007, %v1008
        %v1013 = vmul.u32 %v1007, %v1009
        %v1014 = vshll.u32 %v1011, 16
        %v1015 = vshrl.u32 %v1011, 16
        %v1016 = vshll.u32 %v1012, 16
        %v1017 = vshrl.u32 %v1012, 16
        %vm1018 = vc.u32 %v1010, %v1014
        %v1019 = vsel %vm1018, 1, 0
        %v1020 = vadd.s32 %v1010, %v1014
        %v1021 = vadd.s32 %v1013, %v1019
        %vm1022 = vc.u32 %v1020, %v1016
        %v1023 = vsel %vm1022, 1, 0
        %v1024 = vadd.s32 %v1020, %v1016
        %v1025 = vadd.s32 %v1021, %v1023
        %v1026 = vadd.s32 %v1025, %v1015
        %v1027 = vadd.s32 %v1026, %v1017
        %v1028 = vmul.u32 %v983, %v974
        %v1029 = vadd.s32 %v1005, %v1024
        %vm1030 = vc.u32 %v1005, %v1024
        %v1031 = vadd.s32 %v1027, 1
        %v1032 = vsel %vm1030, %v1031, %v1027
        %v1033 = vadd.s32 %v1028, %v1032
        %v1034 = vadd.s32 %v1033, 536870912
        %v1035 = vshrl.u32 %v1034, 30
        %v1036 = vshll.u32 %v1035, 30
        %v1037 = vsub.s32 %v1033, %v1036
        %vm1038 = vcmp.lt.s32.totalorder %v1037, 0
        %v1039 = vsub.s32 0, %v1037
        %v1040 = vsel %vm1038, %v1039, %v1037
        %v1041 = vclz %v1040
        %v1042 = vsub.s32 %v1041, 2
        %vm1043 = vcmp.gt.s32.totalorder 0, %v1042
        %v1044 = vsel %vm1043, 0, %v1042
        %v1045 = vsub.s32 32, %v1044
        %v1046 = vshll.u32 %v1037, %v1044
        %v1047 = vshrl.u32 %v1029, %v1045
        %v1048 = vor.u32 %v1046, %v1047
        %v1049 = vsub.s32 4294967266, %v1044
        %v1050 = vadd.s32 %v1049, 127
        %v1051 = vshll.u32 %v1050, 23
        %v1052 = vor.u32 4788187, %v1051
        %v1053 = vand.u32 2147483647, %v1052
        %v1055 = vcvt.s32.f32 %v1048
        %v1056 = vmul.f32 %v1055, %v1053
        %v1057 = vxor.u32 %v1056, 2147483648
        %v1058 = vsel %vm937, %v1057, %v1056
        %v1059 = vsub.s32 4, %v1035
        %v1060 = vsel %vm937, %v1059, %v1035
        %v1061 = vsel %vm936, %v286, %v1058
        %v1062 = vsel %vm936, 0, %v1060
        %v1063 = vmul.f32 %v1061, %v1061
        %v1064 = vmul.f32 %v1063, -0.001358992
        %v1065 = vadd.f32 %v1064, 0.041655596
        %v1066 = vmul.f32 %v1063, %v1065
        %v1067 = vadd.f32 %v1066, -0.4999988
        %v1068 = vmul.f32 %v1063, %v1067
        %v1069 = vadd.f32 1.0, %v1068
        %v1070 = vmul.f32 %v1061, %v1061
        %v1071 = vmul.f32 %v1070, -0.00019511016
        %v1072 = vadd.f32 %v1071, 0.008332121
        %v1073 = vmul.f32 %v1070, %v1072
        %v1074 = vadd.f32 %v1073, -0.16666654
        %v1075 = vmul.f32 %v1070, %v1074
        %v1076 = vadd.f32 %v1075, 1.0
        %v1077 = vmul.f32 %v1076, %v1061
        %vm1078 = vweird.f32 %v286
        %v1079 = vadd.s32 %v1062, 3
        %v1080 = vand.u32 %v1079, 3
        %vm1081 = vcmp.lt.s32.totalorder %v1080, 2
        %vm1082 = vcmp.eq.s32.totalorder %v1080, 0
        %v1083 = vxor.u32 %v1077, 2147483648
        %v1084 = vsel %vm1082, %v1069, %v1083
        %vm1085 = vcmp.eq.s32.totalorder %v1080, 2
        %v1086 = vxor.u32 %v1069, 2147483648
        %v1087 = vsel %vm1085, %v1086, %v1077
        %v1088 = vsel %vm1081, %v1084, %v1087
        %v1089 = vsel %vm1078, nan, %v1088
        %v1090 = vand.u32 2147483647, %v288
        %vm1091 = vcmp.le.f32.partialorder %v1090, 0.7853982
        %vm1092 = vcmp.lt.s32.totalorder %v288, 0
        %v1093 = vand.u32 %v288, 2139095040
        %v1094 = vshrl.u32 %v1093, 23
        %v1095 = vsub.s32 %v1094, 127
        %v1096 = vand.u32 2147483647, %v288
        %v1097 = vand.u32 %v1096, 8388607
        %v1098 = vor.u32 %v1097, 8388608
        %v1099 = vsub.s32 0, %v1098
        %v1100 = vadd.s32 %v1095, 1
        %vm1101 = vcmp.gt.s32.totalorder %v1100, 0
        %v1102 = vsel %vm1101, %v1100, 0
        %v1103 = vshrl.u32 %v1102, 5
        %v1104 = vand.u32 %v1102, 31
        %v1105 = vsub.s32 32, %v1104
        %v1106 = vshrl.u32 683565275, %v1105
        %v1107 = vshll.u32 683565275, %v1104
        %v1108 = vshrl.u32 2475754826, %v1105
        %v1109 = vor.u32 %v1107, %v1108
        %v1110 = vshll.u32 2475754826, %v1104
        %v1111 = vshrl.u32 2131351028, %v1105
        %v1112 = vor.u32 %v1110, %v1111
        %v1113 = vshll.u32 2131351028, %v1104
        %v1114 = vshrl.u32 2102212464, %v1105
        %v1115 = vor.u32 %v1113, %v1114
        %v1116 = vshll.u32 2102212464, %v1104
        %v1117 = vshrl.u32 920167782, %v1105
        %v1118 = vor.u32 %v1116, %v1117
        %v1119 = vshll.u32 920167782, %v1104
        %v1120 = vshrl.u32 1326507024, %v1105
        %v1121 = vor.u32 %v1119, %v1120
        %vm1122 = vcmp.lt.s32.totalorder %v1103, 1
        %vm1123 = vcmp.lt.s32.totalorder %v1103, 2
        %vm1124 = vcmp.lt.s32.totalorder %v1103, 3
        %vm1125 = vcmp.lt.s32.totalorder %v1103, 4
        %v1126 = vsel %vm1122, %v1106, %v1109
        %v1127 = vsel %vm1125, %v1115, 2102212464
        %v1128 = vsel %vm1124, %v1112, %v1127
        %v1129 = vsel %vm1123, %v1126, %v1128
        %v1130 = vsel %vm1122, %v1109, %v1112
        %v1131 = vsel %vm1125, %v1118, 920167782
        %v1132 = vsel %vm1124, %v1115, %v1131
        %v1133 = vsel %vm1123, %v1130, %v1132
        %v1134 = vsel %vm1122, %v1112, %v1115
        %v1135 = vsel %vm1125, %v1121, 1326507024
        %v1136 = vsel %vm1124, %v1118, %v1135
        %v1137 = vsel %vm1123, %v1134, %v1136
        %v1138 = vshll.u32 %v1098, 8
        %v1139 = vand.u32 %v1138, 65535
        %v1140 = vshrl.u32 %v1138, 16
        %v1141 = vand.u32 %v1137, 65535
        %v1142 = vshrl.u32 %v1137, 16
        %v1143 = vmul.u32 %v1139, %v1141
        %v1144 = vmul.u32 %v1139, %v1142
        %v1145 = vmul.u32 %v1140, %v1141
        %v1146 = vmul.u32 %v1140, %v1142
        %v1147 = vshll.u32 %v1144, 16
        %v1148 = vshrl.u32 %v1144, 16
        %v1149 = vshll.u32 %v1145, 16
        %v1150 = vshrl.u32 %v1145, 16
        %vm1151 = vc.u32 %v1143, %v1147
        %v1152 = vsel %vm1151, 1, 0
        %v1153 = vadd.s32 %v1143, %v1147
        %v1154 = vadd.s32 %v1146, %v1152
        %vm1155 = vc.u32 %v1153, %v1149
        %v1156 = vsel %vm1155, 1, 0
        %v1157 = vadd.s32 %v1153, %v1149
        %v1158 = vadd.s32 %v1154, %v1156
        %v1159 = vadd.s32 %v1158, %v1148
        %v1160 = vadd.s32 %v1159, %v1150
        %v1161 = vand.u32 %v1138, 65535
        %v1162 = vshrl.u32 %v1138, 16
        %v1163 = vand.u32 %v1133, 65535
        %v1164 = vshrl.u32 %v1133, 16
        %v1165 = vmul.u32 %v1161, %v1163
        %v1166 = vmul.u32 %v1161, %v1164
        %v1167 = vmul.u32 %v1162, %v1163
        %v1168 = vmul.u32 %v1162, %v1164
        %v1169 = vshll.u32 %v1166, 16
        %v1170 = vshrl.u32 %v1166, 16
        %v1171 = vshll.u32 %v1167, 16
        %v1172 = vshrl.u32 %v1167, 16
        %vm1173 = vc.u32 %v1165, %v1169
        %v1174 = vsel %vm1173, 1, 0
        %v1175 = vadd.s32 %v1165, %v1169
        %v1176 = vadd.s32 %v1168, %v1174
        %vm1177 = vc.u32 %v1175, %v1171
        %v1178 = vsel %vm1177, 1, 0
        %v1179 = vadd.s32 %v1175, %v1171
        %v1180 = vadd.s32 %v1176, %v1178
        %v1181 = vadd.s32 %v1180, %v1170
        %v1182 = vadd.s32 %v1181, %v1172
        %v1183 = vmul.u32 %v1138, %v1129
        %v1184 = vadd.s32 %v1160, %v1179
        %vm1185 = vc.u32 %v1160, %v1179
        %v1186 = vadd.s32 %v1182, 1
        %v1187 = vsel %vm1185, %v1186, %v1182
        %v1188 = vadd.s32 %v1183, %v1187
        %v1189 = vadd.s32 %v1188, 536870912
        %v1190 = vshrl.u32 %v1189, 30
        %v1191 = vshll.u32 %v1190, 30
        %v1192 = vsub.s32 %v1188, %v1191
        %vm1193 = vcmp.lt.s32.totalorder %v1192, 0
        %v1194 = vsub.s32 0, %v1192
        %v1195 = vsel %vm1193, %v1194, %v1192
        %v1196 = vclz %v1195
        %v1197 = vsub.s32 %v1196, 2
        %vm1198 = vcmp.gt.s32.totalorder 0, %v1197
        %v1199 = vsel %vm1198, 0, %v1197
        %v1200 = vsub.s32 32, %v1199
        %v1201 = vshll.u32 %v1192, %v1199
        %v1202 = vshrl.u32 %v1184, %v1200
        %v1203 = vor.u32 %v1201, %v1202
        %v1204 = vsub.s32 4294967266, %v1199
        %v1205 = vadd.s32 %v1204, 127
        %v1206 = vshll.u32 %v1205, 23
        %v1207 = vor.u32 4788187, %v1206
        %v1208 = vand.u32 2147483647, %v1207
        %v1210 = vcvt.s32.f32 %v1203
        %v1211 = vmul.f32 %v1210, %v1208
        %v1212 = vxor.u32 %v1211, 2147483648
        %v1213 = vsel %vm1092, %v1212, %v1211
        %v1214 = vsub.s32 4, %v1190
        %v1215 = vsel %vm1092, %v1214, %v1190
        %v1216 = vsel %vm1091, %v288, %v1213
        %v1217 = vsel %vm1091, 0, %v1215
        %v1218 = vmul.f32 %v1216, %v1216
        %v1219 = vmul.f32 %v1218, -0.001358992
        %v1220 = vadd.f32 %v1219, 0.041655596
        %v1221 = vmul.f32 %v1218, %v1220
        %v1222 = vadd.f32 %v1221, -0.4999988
        %v1223 = vmul.f32 %v1218, %v1222
        %v1224 = vadd.f32 1.0, %v1223
        %v1225 = vmul.f32 %v1216, %v1216
        %v1226 = vmul.f32 %v1225, -0.00019511016
        %v1227 = vadd.f32 %v1226, 0.008332121
        %v1228 = vmul.f32 %v1225, %v1227
        %v1229 = vadd.f32 %v1228, -0.16666654
        %v1230 = vmul.f32 %v1225, %v1229
        %v1231 = vadd.f32 %v1230, 1.0
        %v1232 = vmul.f32 %v1231, %v1216
        %vm1233 = vweird.f32 %v288
        %v1234 = vadd.s32 %v1217, 3
        %v1235 = vand.u32 %v1234, 3
        %vm1236 = vcmp.lt.s32.totalorder %v1235, 2
        %vm1237 = vcmp.eq.s32.totalorder %v1235, 0
        %v1238 = vxor.u32 %v1232, 2147483648
        %v1239 = vsel %vm1237, %v1224, %v1238
        %vm1240 = vcmp.eq.s32.totalorder %v1235, 2
        %v1241 = vxor.u32 %v1224, 2147483648
        %v1242 = vsel %vm1240, %v1241, %v1232
        %v1243 = vsel %vm1236, %v1239, %v1242
        %v1244 = vsel %vm1233, nan, %v1243
        %v1245 = vand.u32 2147483647, %v291
        %vm1246 = vcmp.le.f32.partialorder %v1245, 0.7853982
        %vm1247 = vcmp.lt.s32.totalorder %v291, 0
        %v1248 = vand.u32 %v291, 2139095040
        %v1249 = vshrl.u32 %v1248, 23
        %v1250 = vsub.s32 %v1249, 127
        %v1251 = vand.u32 2147483647, %v291
        %v1252 = vand.u32 %v1251, 8388607
        %v1253 = vor.u32 %v1252, 8388608
        %v1254 = vsub.s32 0, %v1253
        %v1255 = vadd.s32 %v1250, 1
        %vm1256 = vcmp.gt.s32.totalorder %v1255, 0
        %v1257 = vsel %vm1256, %v1255, 0
        %v1258 = vshrl.u32 %v1257, 5
        %v1259 = vand.u32 %v1257, 31
        %v1260 = vsub.s32 32, %v1259
        %v1261 = vshrl.u32 683565275, %v1260
        %v1262 = vshll.u32 683565275, %v1259
        %v1263 = vshrl.u32 2475754826, %v1260
        %v1264 = vor.u32 %v1262, %v1263
        %v1265 = vshll.u32 2475754826, %v1259
        %v1266 = vshrl.u32 2131351028, %v1260
        %v1267 = vor.u32 %v1265, %v1266
        %v1268 = vshll.u32 2131351028, %v1259
        %v1269 = vshrl.u32 2102212464, %v1260
        %v1270 = vor.u32 %v1268, %v1269
        %v1271 = vshll.u32 2102212464, %v1259
        %v1272 = vshrl.u32 920167782, %v1260
        %v1273 = vor.u32 %v1271, %v1272
        %v1274 = vshll.u32 920167782, %v1259
        %v1275 = vshrl.u32 1326507024, %v1260
        %v1276 = vor.u32 %v1274, %v1275
        %vm1277 = vcmp.lt.s32.totalorder %v1258, 1
        %vm1278 = vcmp.lt.s32.totalorder %v1258, 2
        %vm1279 = vcmp.lt.s32.totalorder %v1258, 3
        %vm1280 = vcmp.lt.s32.totalorder %v1258, 4
        %v1281 = vsel %vm1277, %v1261, %v1264
        %v1282 = vsel %vm1280, %v1270, 2102212464
        %v1283 = vsel %vm1279, %v1267, %v1282
        %v1284 = vsel %vm1278, %v1281, %v1283
        %v1285 = vsel %vm1277, %v1264, %v1267
        %v1286 = vsel %vm1280, %v1273, 920167782
        %v1287 = vsel %vm1279, %v1270, %v1286
        %v1288 = vsel %vm1278, %v1285, %v1287
        %v1289 = vsel %vm1277, %v1267, %v1270
        %v1290 = vsel %vm1280, %v1276, 1326507024
        %v1291 = vsel %vm1279, %v1273, %v1290
        %v1292 = vsel %vm1278, %v1289, %v1291
        %v1293 = vshll.u32 %v1253, 8
        %v1294 = vand.u32 %v1293, 65535
        %v1295 = vshrl.u32 %v1293, 16
        %v1296 = vand.u32 %v1292, 65535
        %v1297 = vshrl.u32 %v1292, 16
        %v1298 = vmul.u32 %v1294, %v1296
        %v1299 = vmul.u32 %v1294, %v1297
        %v1300 = vmul.u32 %v1295, %v1296
        %v1301 = vmul.u32 %v1295, %v1297
        %v1302 = vshll.u32 %v1299, 16
        %v1303 = vshrl.u32 %v1299, 16
        %v1304 = vshll.u32 %v1300, 16
        %v1305 = vshrl.u32 %v1300, 16
        %vm1306 = vc.u32 %v1298, %v1302
        %v1307 = vsel %vm1306, 1, 0
        %v1308 = vadd.s32 %v1298, %v1302
        %v1309 = vadd.s32 %v1301, %v1307
        %vm1310 = vc.u32 %v1308, %v1304
        %v1311 = vsel %vm1310, 1, 0
        %v1312 = vadd.s32 %v1308, %v1304
        %v1313 = vadd.s32 %v1309, %v1311
        %v1314 = vadd.s32 %v1313, %v1303
        %v1315 = vadd.s32 %v1314, %v1305
        %v1316 = vand.u32 %v1293, 65535
        %v1317 = vshrl.u32 %v1293, 16
        %v1318 = vand.u32 %v1288, 65535
        %v1319 = vshrl.u32 %v1288, 16
        %v1320 = vmul.u32 %v1316, %v1318
        %v1321 = vmul.u32 %v1316, %v1319
        %v1322 = vmul.u32 %v1317, %v1318
        %v1323 = vmul.u32 %v1317, %v1319
        %v1324 = vshll.u32 %v1321, 16
        %v1325 = vshrl.u32 %v1321, 16
        %v1326 = vshll.u32 %v1322, 16
        %v1327 = vshrl.u32 %v1322, 16
        %vm1328 = vc.u32 %v1320, %v1324
        %v1329 = vsel %vm1328, 1, 0
        %v1330 = vadd.s32 %v1320, %v1324
        %v1331 = vadd.s32 %v1323, %v1329
        %vm1332 = vc.u32 %v1330, %v1326
        %v1333 = vsel %vm1332, 1, 0
        %v1334 = vadd.s32 %v1330, %v1326
        %v1335 = vadd.s32 %v1331, %v1333
        %v1336 = vadd.s32 %v1335, %v1325
        %v1337 = vadd.s32 %v1336, %v1327
        %v1338 = vmul.u32 %v1293, %v1284
        %v1339 = vadd.s32 %v1315, %v1334
        %vm1340 = vc.u32 %v1315, %v1334
        %v1341 = vadd.s32 %v1337, 1
        %v1342 = vsel %vm1340, %v1341, %v1337
        %v1343 = vadd.s32 %v1338, %v1342
        %v1344 = vadd.s32 %v1343, 536870912
        %v1345 = vshrl.u32 %v1344, 30
        %v1346 = vshll.u32 %v1345, 30
        %v1347 = vsub.s32 %v1343, %v1346
        %vm1348 = vcmp.lt.s32.totalorder %v1347, 0
        %v1349 = vsub.s32 0, %v1347
        %v1350 = vsel %vm1348, %v1349, %v1347
        %v1351 = vclz %v1350
        %v1352 = vsub.s32 %v1351, 2
        %vm1353 = vcmp.gt.s32.totalorder 0, %v1352
        %v1354 = vsel %vm1353, 0, %v1352
        %v1355 = vsub.s32 32, %v1354
        %v1356 = vshll.u32 %v1347, %v1354
        %v1357 = vshrl.u32 %v1339, %v1355
        %v1358 = vor.u32 %v1356, %v1357
        %v1359 = vsub.s32 4294967266, %v1354
        %v1360 = vadd.s32 %v1359, 127
        %v1361 = vshll.u32 %v1360, 23
        %v1362 = vor.u32 4788187, %v1361
        %v1363 = vand.u32 2147483647, %v1362
        %v1365 = vcvt.s32.f32 %v1358
        %v1366 = vmul.f32 %v1365, %v1363
        %v1367 = vxor.u32 %v1366, 2147483648
        %v1368 = vsel %vm1247, %v1367, %v1366
        %v1369 = vsub.s32 4, %v1345
        %v1370 = vsel %vm1247, %v1369, %v1345
        %v1371 = vsel %vm1246, %v291, %v1368
        %v1372 = vsel %vm1246, 0, %v1370
        %v1373 = vmul.f32 %v1371, %v1371
        %v1374 = vmul.f32 %v1373, -0.001358992
        %v1375 = vadd.f32 %v1374, 0.041655596
        %v1376 = vmul.f32 %v1373, %v1375
        %v1377 = vadd.f32 %v1376, -0.4999988
        %v1378 = vmul.f32 %v1373, %v1377
        %v1379 = vadd.f32 1.0, %v1378
        %v1380 = vmul.f32 %v1371, %v1371
        %v1381 = vmul.f32 %v1380, -0.00019511016
        %v1382 = vadd.f32 %v1381, 0.008332121
        %v1383 = vmul.f32 %v1380, %v1382
        %v1384 = vadd.f32 %v1383, -0.16666654
        %v1385 = vmul.f32 %v1380, %v1384
        %v1386 = vadd.f32 %v1385, 1.0
        %v1387 = vmul.f32 %v1386, %v1371
        %vm1388 = vweird.f32 %v291
        %v1389 = vadd.s32 %v1372, 3
        %v1390 = vand.u32 %v1389, 3
        %vm1391 = vcmp.lt.s32.totalorder %v1390, 2
        %vm1392 = vcmp.eq.s32.totalorder %v1390, 0
        %v1393 = vxor.u32 %v1387, 2147483648
        %v1394 = vsel %vm1392, %v1379, %v1393
        %vm1395 = vcmp.eq.s32.totalorder %v1390, 2
        %v1396 = vxor.u32 %v1379, 2147483648
        %v1397 = vsel %vm1395, %v1396, %v1387
        %v1398 = vsel %vm1391, %v1394, %v1397
        %v1399 = vsel %vm1388, nan, %v1398
        %v1400 = vand.u32 2147483647, %v293
        %vm1401 = vcmp.le.f32.partialorder %v1400, 0.7853982
        %vm1402 = vcmp.lt.s32.totalorder %v293, 0
        %v1403 = vand.u32 %v293, 2139095040
        %v1404 = vshrl.u32 %v1403, 23
        %v1405 = vsub.s32 %v1404, 127
        %v1406 = vand.u32 2147483647, %v293
        %v1407 = vand.u32 %v1406, 8388607
        %v1408 = vor.u32 %v1407, 8388608
        %v1409 = vsub.s32 0, %v1408
        %v1410 = vadd.s32 %v1405, 1
        %vm1411 = vcmp.gt.s32.totalorder %v1410, 0
        %v1412 = vsel %vm1411, %v1410, 0
        %v1413 = vshrl.u32 %v1412, 5
        %v1414 = vand.u32 %v1412, 31
        %v1415 = vsub.s32 32, %v1414
        %v1416 = vshrl.u32 683565275, %v1415
        %v1417 = vshll.u32 683565275, %v1414
        %v1418 = vshrl.u32 2475754826, %v1415
        %v1419 = vor.u32 %v1417, %v1418
        %v1420 = vshll.u32 2475754826, %v1414
        %v1421 = vshrl.u32 2131351028, %v1415
        %v1422 = vor.u32 %v1420, %v1421
        %v1423 = vshll.u32 2131351028, %v1414
        %v1424 = vshrl.u32 2102212464, %v1415
        %v1425 = vor.u32 %v1423, %v1424
        %v1426 = vshll.u32 2102212464, %v1414
        %v1427 = vshrl.u32 920167782, %v1415
        %v1428 = vor.u32 %v1426, %v1427
        %v1429 = vshll.u32 920167782, %v1414
        %v1430 = vshrl.u32 1326507024, %v1415
        %v1431 = vor.u32 %v1429, %v1430
        %vm1432 = vcmp.lt.s32.totalorder %v1413, 1
        %vm1433 = vcmp.lt.s32.totalorder %v1413, 2
        %vm1434 = vcmp.lt.s32.totalorder %v1413, 3
        %vm1435 = vcmp.lt.s32.totalorder %v1413, 4
        %v1436 = vsel %vm1432, %v1416, %v1419
        %v1437 = vsel %vm1435, %v1425, 2102212464
        %v1438 = vsel %vm1434, %v1422, %v1437
        %v1439 = vsel %vm1433, %v1436, %v1438
        %v1440 = vsel %vm1432, %v1419, %v1422
        %v1441 = vsel %vm1435, %v1428, 920167782
        %v1442 = vsel %vm1434, %v1425, %v1441
        %v1443 = vsel %vm1433, %v1440, %v1442
        %v1444 = vsel %vm1432, %v1422, %v1425
        %v1445 = vsel %vm1435, %v1431, 1326507024
        %v1446 = vsel %vm1434, %v1428, %v1445
        %v1447 = vsel %vm1433, %v1444, %v1446
        %v1448 = vshll.u32 %v1408, 8
        %v1449 = vand.u32 %v1448, 65535
        %v1450 = vshrl.u32 %v1448, 16
        %v1451 = vand.u32 %v1447, 65535
        %v1452 = vshrl.u32 %v1447, 16
        %v1453 = vmul.u32 %v1449, %v1451
        %v1454 = vmul.u32 %v1449, %v1452
        %v1455 = vmul.u32 %v1450, %v1451
        %v1456 = vmul.u32 %v1450, %v1452
        %v1457 = vshll.u32 %v1454, 16
        %v1458 = vshrl.u32 %v1454, 16
        %v1459 = vshll.u32 %v1455, 16
        %v1460 = vshrl.u32 %v1455, 16
        %vm1461 = vc.u32 %v1453, %v1457
        %v1462 = vsel %vm1461, 1, 0
        %v1463 = vadd.s32 %v1453, %v1457
        %v1464 = vadd.s32 %v1456, %v1462
        %vm1465 = vc.u32 %v1463, %v1459
        %v1466 = vsel %vm1465, 1, 0
        %v1467 = vadd.s32 %v1463, %v1459
        %v1468 = vadd.s32 %v1464, %v1466
        %v1469 = vadd.s32 %v1468, %v1458
        %v1470 = vadd.s32 %v1469, %v1460
        %v1471 = vand.u32 %v1448, 65535
        %v1472 = vshrl.u32 %v1448, 16
        %v1473 = vand.u32 %v1443, 65535
        %v1474 = vshrl.u32 %v1443, 16
        %v1475 = vmul.u32 %v1471, %v1473
        %v1476 = vmul.u32 %v1471, %v1474
        %v1477 = vmul.u32 %v1472, %v1473
        %v1478 = vmul.u32 %v1472, %v1474
        %v1479 = vshll.u32 %v1476, 16
        %v1480 = vshrl.u32 %v1476, 16
        %v1481 = vshll.u32 %v1477, 16
        %v1482 = vshrl.u32 %v1477, 16
        %vm1483 = vc.u32 %v1475, %v1479
        %v1484 = vsel %vm1483, 1, 0
        %v1485 = vadd.s32 %v1475, %v1479
        %v1486 = vadd.s32 %v1478, %v1484
        %vm1487 = vc.u32 %v1485, %v1481
        %v1488 = vsel %vm1487, 1, 0
        %v1489 = vadd.s32 %v1485, %v1481
        %v1490 = vadd.s32 %v1486, %v1488
        %v1491 = vadd.s32 %v1490, %v1480
        %v1492 = vadd.s32 %v1491, %v1482
        %v1493 = vmul.u32 %v1448, %v1439
        %v1494 = vadd.s32 %v1470, %v1489
        %vm1495 = vc.u32 %v1470, %v1489
        %v1496 = vadd.s32 %v1492, 1
        %v1497 = vsel %vm1495, %v1496, %v1492
        %v1498 = vadd.s32 %v1493, %v1497
        %v1499 = vadd.s32 %v1498, 536870912
        %v1500 = vshrl.u32 %v1499, 30
        %v1501 = vshll.u32 %v1500, 30
        %v1502 = vsub.s32 %v1498, %v1501
        %vm1503 = vcmp.lt.s32.totalorder %v1502, 0
        %v1504 = vsub.s32 0, %v1502
        %v1505 = vsel %vm1503, %v1504, %v1502
        %v1506 = vclz %v1505
        %v1507 = vsub.s32 %v1506, 2
        %vm1508 = vcmp.gt.s32.totalorder 0, %v1507
        %v1509 = vsel %vm1508, 0, %v1507
        %v1510 = vsub.s32 32, %v1509
        %v1511 = vshll.u32 %v1502, %v1509
        %v1512 = vshrl.u32 %v1494, %v1510
        %v1513 = vor.u32 %v1511, %v1512
        %v1514 = vsub.s32 4294967266, %v1509
        %v1515 = vadd.s32 %v1514, 127
        %v1516 = vshll.u32 %v1515, 23
        %v1517 = vor.u32 4788187, %v1516
        %v1518 = vand.u32 2147483647, %v1517
        %v1520 = vcvt.s32.f32 %v1513
        %v1521 = vmul.f32 %v1520, %v1518
        %v1522 = vxor.u32 %v1521, 2147483648
        %v1523 = vsel %vm1402, %v1522, %v1521
        %v1524 = vsub.s32 4, %v1500
        %v1525 = vsel %vm1402, %v1524, %v1500
        %v1526 = vsel %vm1401, %v293, %v1523
        %v1527 = vsel %vm1401, 0, %v1525
        %v1528 = vmul.f32 %v1526, %v1526
        %v1529 = vmul.f32 %v1528, -0.001358992
        %v1530 = vadd.f32 %v1529, 0.041655596
        %v1531 = vmul.f32 %v1528, %v1530
        %v1532 = vadd.f32 %v1531, -0.4999988
        %v1533 = vmul.f32 %v1528, %v1532
        %v1534 = vadd.f32 1.0, %v1533
        %v1535 = vmul.f32 %v1526, %v1526
        %v1536 = vmul.f32 %v1535, -0.00019511016
        %v1537 = vadd.f32 %v1536, 0.008332121
        %v1538 = vmul.f32 %v1535, %v1537
        %v1539 = vadd.f32 %v1538, -0.16666654
        %v1540 = vmul.f32 %v1535, %v1539
        %v1541 = vadd.f32 %v1540, 1.0
        %v1542 = vmul.f32 %v1541, %v1526
        %vm1543 = vweird.f32 %v293
        %v1544 = vadd.s32 %v1527, 3
        %v1545 = vand.u32 %v1544, 3
        %vm1546 = vcmp.lt.s32.totalorder %v1545, 2
        %vm1547 = vcmp.eq.s32.totalorder %v1545, 0
        %v1548 = vxor.u32 %v1542, 2147483648
        %v1549 = vsel %vm1547, %v1534, %v1548
        %vm1550 = vcmp.eq.s32.totalorder %v1545, 2
        %v1551 = vxor.u32 %v1534, 2147483648
        %v1552 = vsel %vm1550, %v1551, %v1542
        %v1553 = vsel %vm1546, %v1549, %v1552
        %v1554 = vsel %vm1543, nan, %v1553
        %v1555 = vand.u32 2147483647, %v296
        %vm1556 = vcmp.le.f32.partialorder %v1555, 0.7853982
        %vm1557 = vcmp.lt.s32.totalorder %v296, 0
        %v1558 = vand.u32 %v296, 2139095040
        %v1559 = vshrl.u32 %v1558, 23
        %v1560 = vsub.s32 %v1559, 127
        %v1561 = vand.u32 2147483647, %v296
        %v1562 = vand.u32 %v1561, 8388607
        %v1563 = vor.u32 %v1562, 8388608
        %v1564 = vsub.s32 0, %v1563
        %v1565 = vadd.s32 %v1560, 1
        %vm1566 = vcmp.gt.s32.totalorder %v1565, 0
        %v1567 = vsel %vm1566, %v1565, 0
        %v1568 = vshrl.u32 %v1567, 5
        %v1569 = vand.u32 %v1567, 31
        %v1570 = vsub.s32 32, %v1569
        %v1571 = vshrl.u32 683565275, %v1570
        %v1572 = vshll.u32 683565275, %v1569
        %v1573 = vshrl.u32 2475754826, %v1570
        %v1574 = vor.u32 %v1572, %v1573
        %v1575 = vshll.u32 2475754826, %v1569
        %v1576 = vshrl.u32 2131351028, %v1570
        %v1577 = vor.u32 %v1575, %v1576
        %v1578 = vshll.u32 2131351028, %v1569
        %v1579 = vshrl.u32 2102212464, %v1570
        %v1580 = vor.u32 %v1578, %v1579
        %v1581 = vshll.u32 2102212464, %v1569
        %v1582 = vshrl.u32 920167782, %v1570
        %v1583 = vor.u32 %v1581, %v1582
        %v1584 = vshll.u32 920167782, %v1569
        %v1585 = vshrl.u32 1326507024, %v1570
        %v1586 = vor.u32 %v1584, %v1585
        %vm1587 = vcmp.lt.s32.totalorder %v1568, 1
        %vm1588 = vcmp.lt.s32.totalorder %v1568, 2
        %vm1589 = vcmp.lt.s32.totalorder %v1568, 3
        %vm1590 = vcmp.lt.s32.totalorder %v1568, 4
        %v1591 = vsel %vm1587, %v1571, %v1574
        %v1592 = vsel %vm1590, %v1580, 2102212464
        %v1593 = vsel %vm1589, %v1577, %v1592
        %v1594 = vsel %vm1588, %v1591, %v1593
        %v1595 = vsel %vm1587, %v1574, %v1577
        %v1596 = vsel %vm1590, %v1583, 920167782
        %v1597 = vsel %vm1589, %v1580, %v1596
        %v1598 = vsel %vm1588, %v1595, %v1597
        %v1599 = vsel %vm1587, %v1577, %v1580
        %v1600 = vsel %vm1590, %v1586, 1326507024
        %v1601 = vsel %vm1589, %v1583, %v1600
        %v1602 = vsel %vm1588, %v1599, %v1601
        %v1603 = vshll.u32 %v1563, 8
        %v1604 = vand.u32 %v1603, 65535
        %v1605 = vshrl.u32 %v1603, 16
        %v1606 = vand.u32 %v1602, 65535
        %v1607 = vshrl.u32 %v1602, 16
        %v1608 = vmul.u32 %v1604, %v1606
        %v1609 = vmul.u32 %v1604, %v1607
        %v1610 = vmul.u32 %v1605, %v1606
        %v1611 = vmul.u32 %v1605, %v1607
        %v1612 = vshll.u32 %v1609, 16
        %v1613 = vshrl.u32 %v1609, 16
        %v1614 = vshll.u32 %v1610, 16
        %v1615 = vshrl.u32 %v1610, 16
        %vm1616 = vc.u32 %v1608, %v1612
        %v1617 = vsel %vm1616, 1, 0
        %v1618 = vadd.s32 %v1608, %v1612
        %v1619 = vadd.s32 %v1611, %v1617
        %vm1620 = vc.u32 %v1618, %v1614
        %v1621 = vsel %vm1620, 1, 0
        %v1622 = vadd.s32 %v1618, %v1614
        %v1623 = vadd.s32 %v1619, %v1621
        %v1624 = vadd.s32 %v1623, %v1613
        %v1625 = vadd.s32 %v1624, %v1615
        %v1626 = vand.u32 %v1603, 65535
        %v1627 = vshrl.u32 %v1603, 16
        %v1628 = vand.u32 %v1598, 65535
        %v1629 = vshrl.u32 %v1598, 16
        %v1630 = vmul.u32 %v1626, %v1628
        %v1631 = vmul.u32 %v1626, %v1629
        %v1632 = vmul.u32 %v1627, %v1628
        %v1633 = vmul.u32 %v1627, %v1629
        %v1634 = vshll.u32 %v1631, 16
        %v1635 = vshrl.u32 %v1631, 16
        %v1636 = vshll.u32 %v1632, 16
        %v1637 = vshrl.u32 %v1632, 16
        %vm1638 = vc.u32 %v1630, %v1634
        %v1639 = vsel %vm1638, 1, 0
        %v1640 = vadd.s32 %v1630, %v1634
        %v1641 = vadd.s32 %v1633, %v1639
        %vm1642 = vc.u32 %v1640, %v1636
        %v1643 = vsel %vm1642, 1, 0
        %v1644 = vadd.s32 %v1640, %v1636
        %v1645 = vadd.s32 %v1641, %v1643
        %v1646 = vadd.s32 %v1645, %v1635
        %v1647 = vadd.s32 %v1646, %v1637
        %v1648 = vmul.u32 %v1603, %v1594
        %v1649 = vadd.s32 %v1625, %v1644
        %vm1650 = vc.u32 %v1625, %v1644
        %v1651 = vadd.s32 %v1647, 1
        %v1652 = vsel %vm1650, %v1651, %v1647
        %v1653 = vadd.s32 %v1648, %v1652
        %v1654 = vadd.s32 %v1653, 536870912
        %v1655 = vshrl.u32 %v1654, 30
        %v1656 = vshll.u32 %v1655, 30
        %v1657 = vsub.s32 %v1653, %v1656
        %vm1658 = vcmp.lt.s32.totalorder %v1657, 0
        %v1659 = vsub.s32 0, %v1657
        %v1660 = vsel %vm1658, %v1659, %v1657
        %v1661 = vclz %v1660
        %v1662 = vsub.s32 %v1661, 2
        %vm1663 = vcmp.gt.s32.totalorder 0, %v1662
        %v1664 = vsel %vm1663, 0, %v1662
        %v1665 = vsub.s32 32, %v1664
        %v1666 = vshll.u32 %v1657, %v1664
        %v1667 = vshrl.u32 %v1649, %v1665
        %v1668 = vor.u32 %v1666, %v1667
        %v1669 = vsub.s32 4294967266, %v1664
        %v1670 = vadd.s32 %v1669, 127
        %v1671 = vshll.u32 %v1670, 23
        %v1672 = vor.u32 4788187, %v1671
        %v1673 = vand.u32 2147483647, %v1672
        %v1675 = vcvt.s32.f32 %v1668
        %v1676 = vmul.f32 %v1675, %v1673
        %v1677 = vxor.u32 %v1676, 2147483648
        %v1678 = vsel %vm1557, %v1677, %v1676
        %v1679 = vsub.s32 4, %v1655
        %v1680 = vsel %vm1557, %v1679, %v1655
        %v1681 = vsel %vm1556, %v296, %v1678
        %v1682 = vsel %vm1556, 0, %v1680
        %v1683 = vmul.f32 %v1681, %v1681
        %v1684 = vmul.f32 %v1683, -0.001358992
        %v1685 = vadd.f32 %v1684, 0.041655596
        %v1686 = vmul.f32 %v1683, %v1685
        %v1687 = vadd.f32 %v1686, -0.4999988
        %v1688 = vmul.f32 %v1683, %v1687
        %v1689 = vadd.f32 1.0, %v1688
        %v1690 = vmul.f32 %v1681, %v1681
        %v1691 = vmul.f32 %v1690, -0.00019511016
        %v1692 = vadd.f32 %v1691, 0.008332121
        %v1693 = vmul.f32 %v1690, %v1692
        %v1694 = vadd.f32 %v1693, -0.16666654
        %v1695 = vmul.f32 %v1690, %v1694
        %v1696 = vadd.f32 %v1695, 1.0
        %v1697 = vmul.f32 %v1696, %v1681
        %vm1698 = vweird.f32 %v296
        %v1699 = vadd.s32 %v1682, 3
        %v1700 = vand.u32 %v1699, 3
        %vm1701 = vcmp.lt.s32.totalorder %v1700, 2
        %vm1702 = vcmp.eq.s32.totalorder %v1700, 0
        %v1703 = vxor.u32 %v1697, 2147483648
        %v1704 = vsel %vm1702, %v1689, %v1703
        %vm1705 = vcmp.eq.s32.totalorder %v1700, 2
        %v1706 = vxor.u32 %v1689, 2147483648
        %v1707 = vsel %vm1705, %v1706, %v1697
        %v1708 = vsel %vm1701, %v1704, %v1707
        %v1709 = vsel %vm1698, nan, %v1708
        %v1710 = vand.u32 2147483647, %v298
        %vm1711 = vcmp.le.f32.partialorder %v1710, 0.7853982
        %vm1712 = vcmp.lt.s32.totalorder %v298, 0
        %v1713 = vand.u32 %v298, 2139095040
        %v1714 = vshrl.u32 %v1713, 23
        %v1715 = vsub.s32 %v1714, 127
        %v1716 = vand.u32 2147483647, %v298
        %v1717 = vand.u32 %v1716, 8388607
        %v1718 = vor.u32 %v1717, 8388608
        %v1719 = vsub.s32 0, %v1718
        %v1720 = vadd.s32 %v1715, 1
        %vm1721 = vcmp.gt.s32.totalorder %v1720, 0
        %v1722 = vsel %vm1721, %v1720, 0
        %v1723 = vshrl.u32 %v1722, 5
        %v1724 = vand.u32 %v1722, 31
        %v1725 = vsub.s32 32, %v1724
        %v1726 = vshrl.u32 683565275, %v1725
        %v1727 = vshll.u32 683565275, %v1724
        %v1728 = vshrl.u32 2475754826, %v1725
        %v1729 = vor.u32 %v1727, %v1728
        %v1730 = vshll.u32 2475754826, %v1724
        %v1731 = vshrl.u32 2131351028, %v1725
        %v1732 = vor.u32 %v1730, %v1731
        %v1733 = vshll.u32 2131351028, %v1724
        %v1734 = vshrl.u32 2102212464, %v1725
        %v1735 = vor.u32 %v1733, %v1734
        %v1736 = vshll.u32 2102212464, %v1724
        %v1737 = vshrl.u32 920167782, %v1725
        %v1738 = vor.u32 %v1736, %v1737
        %v1739 = vshll.u32 920167782, %v1724
        %v1740 = vshrl.u32 1326507024, %v1725
        %v1741 = vor.u32 %v1739, %v1740
        %vm1742 = vcmp.lt.s32.totalorder %v1723, 1
        %vm1743 = vcmp.lt.s32.totalorder %v1723, 2
        %vm1744 = vcmp.lt.s32.totalorder %v1723, 3
        %vm1745 = vcmp.lt.s32.totalorder %v1723, 4
        %v1746 = vsel %vm1742, %v1726, %v1729
        %v1747 = vsel %vm1745, %v1735, 2102212464
        %v1748 = vsel %vm1744, %v1732, %v1747
        %v1749 = vsel %vm1743, %v1746, %v1748
        %v1750 = vsel %vm1742, %v1729, %v1732
        %v1751 = vsel %vm1745, %v1738, 920167782
        %v1752 = vsel %vm1744, %v1735, %v1751
        %v1753 = vsel %vm1743, %v1750, %v1752
        %v1754 = vsel %vm1742, %v1732, %v1735
        %v1755 = vsel %vm1745, %v1741, 1326507024
        %v1756 = vsel %vm1744, %v1738, %v1755
        %v1757 = vsel %vm1743, %v1754, %v1756
        %v1758 = vshll.u32 %v1718, 8
        %v1759 = vand.u32 %v1758, 65535
        %v1760 = vshrl.u32 %v1758, 16
        %v1761 = vand.u32 %v1757, 65535
        %v1762 = vshrl.u32 %v1757, 16
        %v1763 = vmul.u32 %v1759, %v1761
        %v1764 = vmul.u32 %v1759, %v1762
        %v1765 = vmul.u32 %v1760, %v1761
        %v1766 = vmul.u32 %v1760, %v1762
        %v1767 = vshll.u32 %v1764, 16
        %v1768 = vshrl.u32 %v1764, 16
        %v1769 = vshll.u32 %v1765, 16
        %v1770 = vshrl.u32 %v1765, 16
        %vm1771 = vc.u32 %v1763, %v1767
        %v1772 = vsel %vm1771, 1, 0
        %v1773 = vadd.s32 %v1763, %v1767
        %v1774 = vadd.s32 %v1766, %v1772
        %vm1775 = vc.u32 %v1773, %v1769
        %v1776 = vsel %vm1775, 1, 0
        %v1777 = vadd.s32 %v1773, %v1769
        %v1778 = vadd.s32 %v1774, %v1776
        %v1779 = vadd.s32 %v1778, %v1768
        %v1780 = vadd.s32 %v1779, %v1770
        %v1781 = vand.u32 %v1758, 65535
        %v1782 = vshrl.u32 %v1758, 16
        %v1783 = vand.u32 %v1753, 65535
        %v1784 = vshrl.u32 %v1753, 16
        %v1785 = vmul.u32 %v1781, %v1783
        %v1786 = vmul.u32 %v1781, %v1784
        %v1787 = vmul.u32 %v1782, %v1783
        %v1788 = vmul.u32 %v1782, %v1784
        %v1789 = vshll.u32 %v1786, 16
        %v1790 = vshrl.u32 %v1786, 16
        %v1791 = vshll.u32 %v1787, 16
        %v1792 = vshrl.u32 %v1787, 16
        %vm1793 = vc.u32 %v1785, %v1789
        %v1794 = vsel %vm1793, 1, 0
        %v1795 = vadd.s32 %v1785, %v1789
        %v1796 = vadd.s32 %v1788, %v1794
        %vm1797 = vc.u32 %v1795, %v1791
        %v1798 = vsel %vm1797, 1, 0
        %v1799 = vadd.s32 %v1795, %v1791
        %v1800 = vadd.s32 %v1796, %v1798
        %v1801 = vadd.s32 %v1800, %v1790
        %v1802 = vadd.s32 %v1801, %v1792
        %v1803 = vmul.u32 %v1758, %v1749
        %v1804 = vadd.s32 %v1780, %v1799
        %vm1805 = vc.u32 %v1780, %v1799
        %v1806 = vadd.s32 %v1802, 1
        %v1807 = vsel %vm1805, %v1806, %v1802
        %v1808 = vadd.s32 %v1803, %v1807
        %v1809 = vadd.s32 %v1808, 536870912
        %v1810 = vshrl.u32 %v1809, 30
        %v1811 = vshll.u32 %v1810, 30
        %v1812 = vsub.s32 %v1808, %v1811
        %vm1813 = vcmp.lt.s32.totalorder %v1812, 0
        %v1814 = vsub.s32 0, %v1812
        %v1815 = vsel %vm1813, %v1814, %v1812
        %v1816 = vclz %v1815
        %v1817 = vsub.s32 %v1816, 2
        %vm1818 = vcmp.gt.s32.totalorder 0, %v1817
        %v1819 = vsel %vm1818, 0, %v1817
        %v1820 = vsub.s32 32, %v1819
        %v1821 = vshll.u32 %v1812, %v1819
        %v1822 = vshrl.u32 %v1804, %v1820
        %v1823 = vor.u32 %v1821, %v1822
        %v1824 = vsub.s32 4294967266, %v1819
        %v1825 = vadd.s32 %v1824, 127
        %v1826 = vshll.u32 %v1825, 23
        %v1827 = vor.u32 4788187, %v1826
        %v1828 = vand.u32 2147483647, %v1827
        %v1830 = vcvt.s32.f32 %v1823
        %v1831 = vmul.f32 %v1830, %v1828
        %v1832 = vxor.u32 %v1831, 2147483648
        %v1833 = vsel %vm1712, %v1832, %v1831
        %v1834 = vsub.s32 4, %v1810
        %v1835 = vsel %vm1712, %v1834, %v1810
        %v1836 = vsel %vm1711, %v298, %v1833
        %v1837 = vsel %vm1711, 0, %v1835
        %v1838 = vmul.f32 %v1836, %v1836
        %v1839 = vmul.f32 %v1838, -0.001358992
        %v1840 = vadd.f32 %v1839, 0.041655596
        %v1841 = vmul.f32 %v1838, %v1840
        %v1842 = vadd.f32 %v1841, -0.4999988
        %v1843 = vmul.f32 %v1838, %v1842
        %v1844 = vadd.f32 1.0, %v1843
        %v1845 = vmul.f32 %v1836, %v1836
        %v1846 = vmul.f32 %v1845, -0.00019511016
        %v1847 = vadd.f32 %v1846, 0.008332121
        %v1848 = vmul.f32 %v1845, %v1847
        %v1849 = vadd.f32 %v1848, -0.16666654
        %v1850 = vmul.f32 %v1845, %v1849
        %v1851 = vadd.f32 %v1850, 1.0
        %v1852 = vmul.f32 %v1851, %v1836
        %vm1853 = vweird.f32 %v298
        %v1854 = vadd.s32 %v1837, 3
        %v1855 = vand.u32 %v1854, 3
        %vm1856 = vcmp.lt.s32.totalorder %v1855, 2
        %vm1857 = vcmp.eq.s32.totalorder %v1855, 0
        %v1858 = vxor.u32 %v1852, 2147483648
        %v1859 = vsel %vm1857, %v1844, %v1858
        %vm1860 = vcmp.eq.s32.totalorder %v1855, 2
        %v1861 = vxor.u32 %v1844, 2147483648
        %v1862 = vsel %vm1860, %v1861, %v1852
        %v1863 = vsel %vm1856, %v1859, %v1862
        %v1864 = vsel %vm1853, nan, %v1863
        %v1865 = vand.u32 2147483647, %v301
        %vm1866 = vcmp.le.f32.partialorder %v1865, 0.7853982
        %vm1867 = vcmp.lt.s32.totalorder %v301, 0
        %v1868 = vand.u32 %v301, 2139095040
        %v1869 = vshrl.u32 %v1868, 23
        %v1870 = vsub.s32 %v1869, 127
        %v1871 = vand.u32 2147483647, %v301
        %v1872 = vand.u32 %v1871, 8388607
        %v1873 = vor.u32 %v1872, 8388608
        %v1874 = vsub.s32 0, %v1873
        %v1875 = vadd.s32 %v1870, 1
        %vm1876 = vcmp.gt.s32.totalorder %v1875, 0
        %v1877 = vsel %vm1876, %v1875, 0
        %v1878 = vshrl.u32 %v1877, 5
        %v1879 = vand.u32 %v1877, 31
        %v1880 = vsub.s32 32, %v1879
        %v1881 = vshrl.u32 683565275, %v1880
        %v1882 = vshll.u32 683565275, %v1879
        %v1883 = vshrl.u32 2475754826, %v1880
        %v1884 = vor.u32 %v1882, %v1883
        %v1885 = vshll.u32 2475754826, %v1879
        %v1886 = vshrl.u32 2131351028, %v1880
        %v1887 = vor.u32 %v1885, %v1886
        %v1888 = vshll.u32 2131351028, %v1879
        %v1889 = vshrl.u32 2102212464, %v1880
        %v1890 = vor.u32 %v1888, %v1889
        %v1891 = vshll.u32 2102212464, %v1879
        %v1892 = vshrl.u32 920167782, %v1880
        %v1893 = vor.u32 %v1891, %v1892
        %v1894 = vshll.u32 920167782, %v1879
        %v1895 = vshrl.u32 1326507024, %v1880
        %v1896 = vor.u32 %v1894, %v1895
        %vm1897 = vcmp.lt.s32.totalorder %v1878, 1
        %vm1898 = vcmp.lt.s32.totalorder %v1878, 2
        %vm1899 = vcmp.lt.s32.totalorder %v1878, 3
        %vm1900 = vcmp.lt.s32.totalorder %v1878, 4
        %v1901 = vsel %vm1897, %v1881, %v1884
        %v1902 = vsel %vm1900, %v1890, 2102212464
        %v1903 = vsel %vm1899, %v1887, %v1902
        %v1904 = vsel %vm1898, %v1901, %v1903
        %v1905 = vsel %vm1897, %v1884, %v1887
        %v1906 = vsel %vm1900, %v1893, 920167782
        %v1907 = vsel %vm1899, %v1890, %v1906
        %v1908 = vsel %vm1898, %v1905, %v1907
        %v1909 = vsel %vm1897, %v1887, %v1890
        %v1910 = vsel %vm1900, %v1896, 1326507024
        %v1911 = vsel %vm1899, %v1893, %v1910
        %v1912 = vsel %vm1898, %v1909, %v1911
        %v1913 = vshll.u32 %v1873, 8
        %v1914 = vand.u32 %v1913, 65535
        %v1915 = vshrl.u32 %v1913, 16
        %v1916 = vand.u32 %v1912, 65535
        %v1917 = vshrl.u32 %v1912, 16
        %v1918 = vmul.u32 %v1914, %v1916
        %v1919 = vmul.u32 %v1914, %v1917
        %v1920 = vmul.u32 %v1915, %v1916
        %v1921 = vmul.u32 %v1915, %v1917
        %v1922 = vshll.u32 %v1919, 16
        %v1923 = vshrl.u32 %v1919, 16
        %v1924 = vshll.u32 %v1920, 16
        %v1925 = vshrl.u32 %v1920, 16
        %vm1926 = vc.u32 %v1918, %v1922
        %v1927 = vsel %vm1926, 1, 0
        %v1928 = vadd.s32 %v1918, %v1922
        %v1929 = vadd.s32 %v1921, %v1927
        %vm1930 = vc.u32 %v1928, %v1924
        %v1931 = vsel %vm1930, 1, 0
        %v1932 = vadd.s32 %v1928, %v1924
        %v1933 = vadd.s32 %v1929, %v1931
        %v1934 = vadd.s32 %v1933, %v1923
        %v1935 = vadd.s32 %v1934, %v1925
        %v1936 = vand.u32 %v1913, 65535
        %v1937 = vshrl.u32 %v1913, 16
        %v1938 = vand.u32 %v1908, 65535
        %v1939 = vshrl.u32 %v1908, 16
        %v1940 = vmul.u32 %v1936, %v1938
        %v1941 = vmul.u32 %v1936, %v1939
        %v1942 = vmul.u32 %v1937, %v1938
        %v1943 = vmul.u32 %v1937, %v1939
        %v1944 = vshll.u32 %v1941, 16
        %v1945 = vshrl.u32 %v1941, 16
        %v1946 = vshll.u32 %v1942, 16
        %v1947 = vshrl.u32 %v1942, 16
        %vm1948 = vc.u32 %v1940, %v1944
        %v1949 = vsel %vm1948, 1, 0
        %v1950 = vadd.s32 %v1940, %v1944
        %v1951 = vadd.s32 %v1943, %v1949
        %vm1952 = vc.u32 %v1950, %v1946
        %v1953 = vsel %vm1952, 1, 0
        %v1954 = vadd.s32 %v1950, %v1946
        %v1955 = vadd.s32 %v1951, %v1953
        %v1956 = vadd.s32 %v1955, %v1945
        %v1957 = vadd.s32 %v1956, %v1947
        %v1958 = vmul.u32 %v1913, %v1904
        %v1959 = vadd.s32 %v1935, %v1954
        %vm1960 = vc.u32 %v1935, %v1954
        %v1961 = vadd.s32 %v1957, 1
        %v1962 = vsel %vm1960, %v1961, %v1957
        %v1963 = vadd.s32 %v1958, %v1962
        %v1964 = vadd.s32 %v1963, 536870912
        %v1965 = vshrl.u32 %v1964, 30
        %v1966 = vshll.u32 %v1965, 30
        %v1967 = vsub.s32 %v1963, %v1966
        %vm1968 = vcmp.lt.s32.totalorder %v1967, 0
        %v1969 = vsub.s32 0, %v1967
        %v1970 = vsel %vm1968, %v1969, %v1967
        %v1971 = vclz %v1970
        %v1972 = vsub.s32 %v1971, 2
        %vm1973 = vcmp.gt.s32.totalorder 0, %v1972
        %v1974 = vsel %vm1973, 0, %v1972
        %v1975 = vsub.s32 32, %v1974
        %v1976 = vshll.u32 %v1967, %v1974
        %v1977 = vshrl.u32 %v1959, %v1975
        %v1978 = vor.u32 %v1976, %v1977
        %v1979 = vsub.s32 4294967266, %v1974
        %v1980 = vadd.s32 %v1979, 127
        %v1981 = vshll.u32 %v1980, 23
        %v1982 = vor.u32 4788187, %v1981
        %v1983 = vand.u32 2147483647, %v1982
        %v1985 = vcvt.s32.f32 %v1978
        %v1986 = vmul.f32 %v1985, %v1983
        %v1987 = vxor.u32 %v1986, 2147483648
        %v1988 = vsel %vm1867, %v1987, %v1986
        %v1989 = vsub.s32 4, %v1965
        %v1990 = vsel %vm1867, %v1989, %v1965
        %v1991 = vsel %vm1866, %v301, %v1988
        %v1992 = vsel %vm1866, 0, %v1990
        %v1993 = vmul.f32 %v1991, %v1991
        %v1994 = vmul.f32 %v1993, -0.001358992
        %v1995 = vadd.f32 %v1994, 0.041655596
        %v1996 = vmul.f32 %v1993, %v1995
        %v1997 = vadd.f32 %v1996, -0.4999988
        %v1998 = vmul.f32 %v1993, %v1997
        %v1999 = vadd.f32 1.0, %v1998
        %v2000 = vmul.f32 %v1991, %v1991
        %v2001 = vmul.f32 %v2000, -0.00019511016
        %v2002 = vadd.f32 %v2001, 0.008332121
        %v2003 = vmul.f32 %v2000, %v2002
        %v2004 = vadd.f32 %v2003, -0.16666654
        %v2005 = vmul.f32 %v2000, %v2004
        %v2006 = vadd.f32 %v2005, 1.0
        %v2007 = vmul.f32 %v2006, %v1991
        %vm2008 = vweird.f32 %v301
        %v2009 = vadd.s32 %v1992, 3
        %v2010 = vand.u32 %v2009, 3
        %vm2011 = vcmp.lt.s32.totalorder %v2010, 2
        %vm2012 = vcmp.eq.s32.totalorder %v2010, 0
        %v2013 = vxor.u32 %v2007, 2147483648
        %v2014 = vsel %vm2012, %v1999, %v2013
        %vm2015 = vcmp.eq.s32.totalorder %v2010, 2
        %v2016 = vxor.u32 %v1999, 2147483648
        %v2017 = vsel %vm2015, %v2016, %v2007
        %v2018 = vsel %vm2011, %v2014, %v2017
        %v2019 = vsel %vm2008, nan, %v2018
        %v2020 = vand.u32 2147483647, %v303
        %vm2021 = vcmp.le.f32.partialorder %v2020, 0.7853982
        %vm2022 = vcmp.lt.s32.totalorder %v303, 0
        %v2023 = vand.u32 %v303, 2139095040
        %v2024 = vshrl.u32 %v2023, 23
        %v2025 = vsub.s32 %v2024, 127
        %v2026 = vand.u32 2147483647, %v303
        %v2027 = vand.u32 %v2026, 8388607
        %v2028 = vor.u32 %v2027, 8388608
        %v2029 = vsub.s32 0, %v2028
        %v2030 = vadd.s32 %v2025, 1
        %vm2031 = vcmp.gt.s32.totalorder %v2030, 0
        %v2032 = vsel %vm2031, %v2030, 0
        %v2033 = vshrl.u32 %v2032, 5
        %v2034 = vand.u32 %v2032, 31
        %v2035 = vsub.s32 32, %v2034
        %v2036 = vshrl.u32 683565275, %v2035
        %v2037 = vshll.u32 683565275, %v2034
        %v2038 = vshrl.u32 2475754826, %v2035
        %v2039 = vor.u32 %v2037, %v2038
        %v2040 = vshll.u32 2475754826, %v2034
        %v2041 = vshrl.u32 2131351028, %v2035
        %v2042 = vor.u32 %v2040, %v2041
        %v2043 = vshll.u32 2131351028, %v2034
        %v2044 = vshrl.u32 2102212464, %v2035
        %v2045 = vor.u32 %v2043, %v2044
        %v2046 = vshll.u32 2102212464, %v2034
        %v2047 = vshrl.u32 920167782, %v2035
        %v2048 = vor.u32 %v2046, %v2047
        %v2049 = vshll.u32 920167782, %v2034
        %v2050 = vshrl.u32 1326507024, %v2035
        %v2051 = vor.u32 %v2049, %v2050
        %vm2052 = vcmp.lt.s32.totalorder %v2033, 1
        %vm2053 = vcmp.lt.s32.totalorder %v2033, 2
        %vm2054 = vcmp.lt.s32.totalorder %v2033, 3
        %vm2055 = vcmp.lt.s32.totalorder %v2033, 4
        %v2056 = vsel %vm2052, %v2036, %v2039
        %v2057 = vsel %vm2055, %v2045, 2102212464
        %v2058 = vsel %vm2054, %v2042, %v2057
        %v2059 = vsel %vm2053, %v2056, %v2058
        %v2060 = vsel %vm2052, %v2039, %v2042
        %v2061 = vsel %vm2055, %v2048, 920167782
        %v2062 = vsel %vm2054, %v2045, %v2061
        %v2063 = vsel %vm2053, %v2060, %v2062
        %v2064 = vsel %vm2052, %v2042, %v2045
        %v2065 = vsel %vm2055, %v2051, 1326507024
        %v2066 = vsel %vm2054, %v2048, %v2065
        %v2067 = vsel %vm2053, %v2064, %v2066
        %v2068 = vshll.u32 %v2028, 8
        %v2069 = vand.u32 %v2068, 65535
        %v2070 = vshrl.u32 %v2068, 16
        %v2071 = vand.u32 %v2067, 65535
        %v2072 = vshrl.u32 %v2067, 16
        %v2073 = vmul.u32 %v2069, %v2071
        %v2074 = vmul.u32 %v2069, %v2072
        %v2075 = vmul.u32 %v2070, %v2071
        %v2076 = vmul.u32 %v2070, %v2072
        %v2077 = vshll.u32 %v2074, 16
        %v2078 = vshrl.u32 %v2074, 16
        %v2079 = vshll.u32 %v2075, 16
        %v2080 = vshrl.u32 %v2075, 16
        %vm2081 = vc.u32 %v2073, %v2077
        %v2082 = vsel %vm2081, 1, 0
        %v2083 = vadd.s32 %v2073, %v2077
        %v2084 = vadd.s32 %v2076, %v2082
        %vm2085 = vc.u32 %v2083, %v2079
        %v2086 = vsel %vm2085, 1, 0
        %v2087 = vadd.s32 %v2083, %v2079
        %v2088 = vadd.s32 %v2084, %v2086
        %v2089 = vadd.s32 %v2088, %v2078
        %v2090 = vadd.s32 %v2089, %v2080
        %v2091 = vand.u32 %v2068, 65535
        %v2092 = vshrl.u32 %v2068, 16
        %v2093 = vand.u32 %v2063, 65535
        %v2094 = vshrl.u32 %v2063, 16
        %v2095 = vmul.u32 %v2091, %v2093
        %v2096 = vmul.u32 %v2091, %v2094
        %v2097 = vmul.u32 %v2092, %v2093
        %v2098 = vmul.u32 %v2092, %v2094
        %v2099 = vshll.u32 %v2096, 16
        %v2100 = vshrl.u32 %v2096, 16
        %v2101 = vshll.u32 %v2097, 16
        %v2102 = vshrl.u32 %v2097, 16
        %vm2103 = vc.u32 %v2095, %v2099
        %v2104 = vsel %vm2103, 1, 0
        %v2105 = vadd.s32 %v2095, %v2099
        %v2106 = vadd.s32 %v2098, %v2104
        %vm2107 = vc.u32 %v2105, %v2101
        %v2108 = vsel %vm2107, 1, 0
        %v2109 = vadd.s32 %v2105, %v2101
        %v2110 = vadd.s32 %v2106, %v2108
        %v2111 = vadd.s32 %v2110, %v2100
        %v2112 = vadd.s32 %v2111, %v2102
        %v2113 = vmul.u32 %v2068, %v2059
        %v2114 = vadd.s32 %v2090, %v2109
        %vm2115 = vc.u32 %v2090, %v2109
        %v2116 = vadd.s32 %v2112, 1
        %v2117 = vsel %vm2115, %v2116, %v2112
        %v2118 = vadd.s32 %v2113, %v2117
        %v2119 = vadd.s32 %v2118, 536870912
        %v2120 = vshrl.u32 %v2119, 30
        %v2121 = vshll.u32 %v2120, 30
        %v2122 = vsub.s32 %v2118, %v2121
        %vm2123 = vcmp.lt.s32.totalorder %v2122, 0
        %v2124 = vsub.s32 0, %v2122
        %v2125 = vsel %vm2123, %v2124, %v2122
        %v2126 = vclz %v2125
        %v2127 = vsub.s32 %v2126, 2
        %vm2128 = vcmp.gt.s32.totalorder 0, %v2127
        %v2129 = vsel %vm2128, 0, %v2127
        %v2130 = vsub.s32 32, %v2129
        %v2131 = vshll.u32 %v2122, %v2129
        %v2132 = vshrl.u32 %v2114, %v2130
        %v2133 = vor.u32 %v2131, %v2132
        %v2134 = vsub.s32 4294967266, %v2129
        %v2135 = vadd.s32 %v2134, 127
        %v2136 = vshll.u32 %v2135, 23
        %v2137 = vor.u32 4788187, %v2136
        %v2138 = vand.u32 2147483647, %v2137
        %v2140 = vcvt.s32.f32 %v2133
        %v2141 = vmul.f32 %v2140, %v2138
        %v2142 = vxor.u32 %v2141, 2147483648
        %v2143 = vsel %vm2022, %v2142, %v2141
        %v2144 = vsub.s32 4, %v2120
        %v2145 = vsel %vm2022, %v2144, %v2120
        %v2146 = vsel %vm2021, %v303, %v2143
        %v2147 = vsel %vm2021, 0, %v2145
        %v2148 = vmul.f32 %v2146, %v2146
        %v2149 = vmul.f32 %v2148, -0.001358992
        %v2150 = vadd.f32 %v2149, 0.041655596
        %v2151 = vmul.f32 %v2148, %v2150
        %v2152 = vadd.f32 %v2151, -0.4999988
        %v2153 = vmul.f32 %v2148, %v2152
        %v2154 = vadd.f32 1.0, %v2153
        %v2155 = vmul.f32 %v2146, %v2146
        %v2156 = vmul.f32 %v2155, -0.00019511016
        %v2157 = vadd.f32 %v2156, 0.008332121
        %v2158 = vmul.f32 %v2155, %v2157
        %v2159 = vadd.f32 %v2158, -0.16666654
        %v2160 = vmul.f32 %v2155, %v2159
        %v2161 = vadd.f32 %v2160, 1.0
        %v2162 = vmul.f32 %v2161, %v2146
        %vm2163 = vweird.f32 %v303
        %v2164 = vadd.s32 %v2147, 3
        %v2165 = vand.u32 %v2164, 3
        %vm2166 = vcmp.lt.s32.totalorder %v2165, 2
        %vm2167 = vcmp.eq.s32.totalorder %v2165, 0
        %v2168 = vxor.u32 %v2162, 2147483648
        %v2169 = vsel %vm2167, %v2154, %v2168
        %vm2170 = vcmp.eq.s32.totalorder %v2165, 2
        %v2171 = vxor.u32 %v2154, 2147483648
        %v2172 = vsel %vm2170, %v2171, %v2162
        %v2173 = vsel %vm2166, %v2169, %v2172
        %v2174 = vsel %vm2163, nan, %v2173
        %v2175 = vand.u32 2147483647, %v306
        %vm2176 = vcmp.le.f32.partialorder %v2175, 0.7853982
        %vm2177 = vcmp.lt.s32.totalorder %v306, 0
        %v2178 = vand.u32 %v306, 2139095040
        %v2179 = vshrl.u32 %v2178, 23
        %v2180 = vsub.s32 %v2179, 127
        %v2181 = vand.u32 2147483647, %v306
        %v2182 = vand.u32 %v2181, 8388607
        %v2183 = vor.u32 %v2182, 8388608
        %v2184 = vsub.s32 0, %v2183
        %v2185 = vadd.s32 %v2180, 1
        %vm2186 = vcmp.gt.s32.totalorder %v2185, 0
        %v2187 = vsel %vm2186, %v2185, 0
        %v2188 = vshrl.u32 %v2187, 5
        %v2189 = vand.u32 %v2187, 31
        %v2190 = vsub.s32 32, %v2189
        %v2191 = vshrl.u32 683565275, %v2190
        %v2192 = vshll.u32 683565275, %v2189
        %v2193 = vshrl.u32 2475754826, %v2190
        %v2194 = vor.u32 %v2192, %v2193
        %v2195 = vshll.u32 2475754826, %v2189
        %v2196 = vshrl.u32 2131351028, %v2190
        %v2197 = vor.u32 %v2195, %v2196
        %v2198 = vshll.u32 2131351028, %v2189
        %v2199 = vshrl.u32 2102212464, %v2190
        %v2200 = vor.u32 %v2198, %v2199
        %v2201 = vshll.u32 2102212464, %v2189
        %v2202 = vshrl.u32 920167782, %v2190
        %v2203 = vor.u32 %v2201, %v2202
        %v2204 = vshll.u32 920167782, %v2189
        %v2205 = vshrl.u32 1326507024, %v2190
        %v2206 = vor.u32 %v2204, %v2205
        %vm2207 = vcmp.lt.s32.totalorder %v2188, 1
        %vm2208 = vcmp.lt.s32.totalorder %v2188, 2
        %vm2209 = vcmp.lt.s32.totalorder %v2188, 3
        %vm2210 = vcmp.lt.s32.totalorder %v2188, 4
        %v2211 = vsel %vm2207, %v2191, %v2194
        %v2212 = vsel %vm2210, %v2200, 2102212464
        %v2213 = vsel %vm2209, %v2197, %v2212
        %v2214 = vsel %vm2208, %v2211, %v2213
        %v2215 = vsel %vm2207, %v2194, %v2197
        %v2216 = vsel %vm2210, %v2203, 920167782
        %v2217 = vsel %vm2209, %v2200, %v2216
        %v2218 = vsel %vm2208, %v2215, %v2217
        %v2219 = vsel %vm2207, %v2197, %v2200
        %v2220 = vsel %vm2210, %v2206, 1326507024
        %v2221 = vsel %vm2209, %v2203, %v2220
        %v2222 = vsel %vm2208, %v2219, %v2221
        %v2223 = vshll.u32 %v2183, 8
        %v2224 = vand.u32 %v2223, 65535
        %v2225 = vshrl.u32 %v2223, 16
        %v2226 = vand.u32 %v2222, 65535
        %v2227 = vshrl.u32 %v2222, 16
        %v2228 = vmul.u32 %v2224, %v2226
        %v2229 = vmul.u32 %v2224, %v2227
        %v2230 = vmul.u32 %v2225, %v2226
        %v2231 = vmul.u32 %v2225, %v2227
        %v2232 = vshll.u32 %v2229, 16
        %v2233 = vshrl.u32 %v2229, 16
        %v2234 = vshll.u32 %v2230, 16
        %v2235 = vshrl.u32 %v2230, 16
        %vm2236 = vc.u32 %v2228, %v2232
        %v2237 = vsel %vm2236, 1, 0
        %v2238 = vadd.s32 %v2228, %v2232
        %v2239 = vadd.s32 %v2231, %v2237
        %vm2240 = vc.u32 %v2238, %v2234
        %v2241 = vsel %vm2240, 1, 0
        %v2242 = vadd.s32 %v2238, %v2234
        %v2243 = vadd.s32 %v2239, %v2241
        %v2244 = vadd.s32 %v2243, %v2233
        %v2245 = vadd.s32 %v2244, %v2235
        %v2246 = vand.u32 %v2223, 65535
        %v2247 = vshrl.u32 %v2223, 16
        %v2248 = vand.u32 %v2218, 65535
        %v2249 = vshrl.u32 %v2218, 16
        %v2250 = vmul.u32 %v2246, %v2248
        %v2251 = vmul.u32 %v2246, %v2249
        %v2252 = vmul.u32 %v2247, %v2248
        %v2253 = vmul.u32 %v2247, %v2249
        %v2254 = vshll.u32 %v2251, 16
        %v2255 = vshrl.u32 %v2251, 16
        %v2256 = vshll.u32 %v2252, 16
        %v2257 = vshrl.u32 %v2252, 16
        %vm2258 = vc.u32 %v2250, %v2254
        %v2259 = vsel %vm2258, 1, 0
        %v2260 = vadd.s32 %v2250, %v2254
        %v2261 = vadd.s32 %v2253, %v2259
        %vm2262 = vc.u32 %v2260, %v2256
        %v2263 = vsel %vm2262, 1, 0
        %v2264 = vadd.s32 %v2260, %v2256
        %v2265 = vadd.s32 %v2261, %v2263
        %v2266 = vadd.s32 %v2265, %v2255
        %v2267 = vadd.s32 %v2266, %v2257
        %v2268 = vmul.u32 %v2223, %v2214
        %v2269 = vadd.s32 %v2245, %v2264
        %vm2270 = vc.u32 %v2245, %v2264
        %v2271 = vadd.s32 %v2267, 1
        %v2272 = vsel %vm2270, %v2271, %v2267
        %v2273 = vadd.s32 %v2268, %v2272
        %v2274 = vadd.s32 %v2273, 536870912
        %v2275 = vshrl.u32 %v2274, 30
        %v2276 = vshll.u32 %v2275, 30
        %v2277 = vsub.s32 %v2273, %v2276
        %vm2278 = vcmp.lt.s32.totalorder %v2277, 0
        %v2279 = vsub.s32 0, %v2277
        %v2280 = vsel %vm2278, %v2279, %v2277
        %v2281 = vclz %v2280
        %v2282 = vsub.s32 %v2281, 2
        %vm2283 = vcmp.gt.s32.totalorder 0, %v2282
        %v2284 = vsel %vm2283, 0, %v2282
        %v2285 = vsub.s32 32, %v2284
        %v2286 = vshll.u32 %v2277, %v2284
        %v2287 = vshrl.u32 %v2269, %v2285
        %v2288 = vor.u32 %v2286, %v2287
        %v2289 = vsub.s32 4294967266, %v2284
        %v2290 = vadd.s32 %v2289, 127
        %v2291 = vshll.u32 %v2290, 23
        %v2292 = vor.u32 4788187, %v2291
        %v2293 = vand.u32 2147483647, %v2292
        %v2295 = vcvt.s32.f32 %v2288
        %v2296 = vmul.f32 %v2295, %v2293
        %v2297 = vxor.u32 %v2296, 2147483648
        %v2298 = vsel %vm2177, %v2297, %v2296
        %v2299 = vsub.s32 4, %v2275
        %v2300 = vsel %vm2177, %v2299, %v2275
        %v2301 = vsel %vm2176, %v306, %v2298
        %v2302 = vsel %vm2176, 0, %v2300
        %v2303 = vmul.f32 %v2301, %v2301
        %v2304 = vmul.f32 %v2303, -0.001358992
        %v2305 = vadd.f32 %v2304, 0.041655596
        %v2306 = vmul.f32 %v2303, %v2305
        %v2307 = vadd.f32 %v2306, -0.4999988
        %v2308 = vmul.f32 %v2303, %v2307
        %v2309 = vadd.f32 1.0, %v2308
        %v2310 = vmul.f32 %v2301, %v2301
        %v2311 = vmul.f32 %v2310, -0.00019511016
        %v2312 = vadd.f32 %v2311, 0.008332121
        %v2313 = vmul.f32 %v2310, %v2312
        %v2314 = vadd.f32 %v2313, -0.16666654
        %v2315 = vmul.f32 %v2310, %v2314
        %v2316 = vadd.f32 %v2315, 1.0
        %v2317 = vmul.f32 %v2316, %v2301
        %vm2318 = vweird.f32 %v306
        %v2319 = vadd.s32 %v2302, 3
        %v2320 = vand.u32 %v2319, 3
        %vm2321 = vcmp.lt.s32.totalorder %v2320, 2
        %vm2322 = vcmp.eq.s32.totalorder %v2320, 0
        %v2323 = vxor.u32 %v2317, 2147483648
        %v2324 = vsel %vm2322, %v2309, %v2323
        %vm2325 = vcmp.eq.s32.totalorder %v2320, 2
        %v2326 = vxor.u32 %v2309, 2147483648
        %v2327 = vsel %vm2325, %v2326, %v2317
        %v2328 = vsel %vm2321, %v2324, %v2327
        %v2329 = vsel %vm2318, nan, %v2328
        %v2330 = vand.u32 2147483647, %v308
        %vm2331 = vcmp.le.f32.partialorder %v2330, 0.7853982
        %vm2332 = vcmp.lt.s32.totalorder %v308, 0
        %v2333 = vand.u32 %v308, 2139095040
        %v2334 = vshrl.u32 %v2333, 23
        %v2335 = vsub.s32 %v2334, 127
        %v2336 = vand.u32 2147483647, %v308
        %v2337 = vand.u32 %v2336, 8388607
        %v2338 = vor.u32 %v2337, 8388608
        %v2339 = vsub.s32 0, %v2338
        %v2340 = vadd.s32 %v2335, 1
        %vm2341 = vcmp.gt.s32.totalorder %v2340, 0
        %v2342 = vsel %vm2341, %v2340, 0
        %v2343 = vshrl.u32 %v2342, 5
        %v2344 = vand.u32 %v2342, 31
        %v2345 = vsub.s32 32, %v2344
        %v2346 = vshrl.u32 683565275, %v2345
        %v2347 = vshll.u32 683565275, %v2344
        %v2348 = vshrl.u32 2475754826, %v2345
        %v2349 = vor.u32 %v2347, %v2348
        %v2350 = vshll.u32 2475754826, %v2344
        %v2351 = vshrl.u32 2131351028, %v2345
        %v2352 = vor.u32 %v2350, %v2351
        %v2353 = vshll.u32 2131351028, %v2344
        %v2354 = vshrl.u32 2102212464, %v2345
        %v2355 = vor.u32 %v2353, %v2354
        %v2356 = vshll.u32 2102212464, %v2344
        %v2357 = vshrl.u32 920167782, %v2345
        %v2358 = vor.u32 %v2356, %v2357
        %v2359 = vshll.u32 920167782, %v2344
        %v2360 = vshrl.u32 1326507024, %v2345
        %v2361 = vor.u32 %v2359, %v2360
        %vm2362 = vcmp.lt.s32.totalorder %v2343, 1
        %vm2363 = vcmp.lt.s32.totalorder %v2343, 2
        %vm2364 = vcmp.lt.s32.totalorder %v2343, 3
        %vm2365 = vcmp.lt.s32.totalorder %v2343, 4
        %v2366 = vsel %vm2362, %v2346, %v2349
        %v2367 = vsel %vm2365, %v2355, 2102212464
        %v2368 = vsel %vm2364, %v2352, %v2367
        %v2369 = vsel %vm2363, %v2366, %v2368
        %v2370 = vsel %vm2362, %v2349, %v2352
        %v2371 = vsel %vm2365, %v2358, 920167782
        %v2372 = vsel %vm2364, %v2355, %v2371
        %v2373 = vsel %vm2363, %v2370, %v2372
        %v2374 = vsel %vm2362, %v2352, %v2355
        %v2375 = vsel %vm2365, %v2361, 1326507024
        %v2376 = vsel %vm2364, %v2358, %v2375
        %v2377 = vsel %vm2363, %v2374, %v2376
        %v2378 = vshll.u32 %v2338, 8
        %v2379 = vand.u32 %v2378, 65535
        %v2380 = vshrl.u32 %v2378, 16
        %v2381 = vand.u32 %v2377, 65535
        %v2382 = vshrl.u32 %v2377, 16
        %v2383 = vmul.u32 %v2379, %v2381
        %v2384 = vmul.u32 %v2379, %v2382
        %v2385 = vmul.u32 %v2380, %v2381
        %v2386 = vmul.u32 %v2380, %v2382
        %v2387 = vshll.u32 %v2384, 16
        %v2388 = vshrl.u32 %v2384, 16
        %v2389 = vshll.u32 %v2385, 16
        %v2390 = vshrl.u32 %v2385, 16
        %vm2391 = vc.u32 %v2383, %v2387
        %v2392 = vsel %vm2391, 1, 0
        %v2393 = vadd.s32 %v2383, %v2387
        %v2394 = vadd.s32 %v2386, %v2392
        %vm2395 = vc.u32 %v2393, %v2389
        %v2396 = vsel %vm2395, 1, 0
        %v2397 = vadd.s32 %v2393, %v2389
        %v2398 = vadd.s32 %v2394, %v2396
        %v2399 = vadd.s32 %v2398, %v2388
        %v2400 = vadd.s32 %v2399, %v2390
        %v2401 = vand.u32 %v2378, 65535
        %v2402 = vshrl.u32 %v2378, 16
        %v2403 = vand.u32 %v2373, 65535
        %v2404 = vshrl.u32 %v2373, 16
        %v2405 = vmul.u32 %v2401, %v2403
        %v2406 = vmul.u32 %v2401, %v2404
        %v2407 = vmul.u32 %v2402, %v2403
        %v2408 = vmul.u32 %v2402, %v2404
        %v2409 = vshll.u32 %v2406, 16
        %v2410 = vshrl.u32 %v2406, 16
        %v2411 = vshll.u32 %v2407, 16
        %v2412 = vshrl.u32 %v2407, 16
        %vm2413 = vc.u32 %v2405, %v2409
        %v2414 = vsel %vm2413, 1, 0
        %v2415 = vadd.s32 %v2405, %v2409
        %v2416 = vadd.s32 %v2408, %v2414
        %vm2417 = vc.u32 %v2415, %v2411
        %v2418 = vsel %vm2417, 1, 0
        %v2419 = vadd.s32 %v2415, %v2411
        %v2420 = vadd.s32 %v2416, %v2418
        %v2421 = vadd.s32 %v2420, %v2410
        %v2422 = vadd.s32 %v2421, %v2412
        %v2423 = vmul.u32 %v2378, %v2369
        %v2424 = vadd.s32 %v2400, %v2419
        %vm2425 = vc.u32 %v2400, %v2419
        %v2426 = vadd.s32 %v2422, 1
        %v2427 = vsel %vm2425, %v2426, %v2422
        %v2428 = vadd.s32 %v2423, %v2427
        %v2429 = vadd.s32 %v2428, 536870912
        %v2430 = vshrl.u32 %v2429, 30
        %v2431 = vshll.u32 %v2430, 30
        %v2432 = vsub.s32 %v2428, %v2431
        %vm2433 = vcmp.lt.s32.totalorder %v2432, 0
        %v2434 = vsub.s32 0, %v2432
        %v2435 = vsel %vm2433, %v2434, %v2432
        %v2436 = vclz %v2435
        %v2437 = vsub.s32 %v2436, 2
        %vm2438 = vcmp.gt.s32.totalorder 0, %v2437
        %v2439 = vsel %vm2438, 0, %v2437
        %v2440 = vsub.s32 32, %v2439
        %v2441 = vshll.u32 %v2432, %v2439
        %v2442 = vshrl.u32 %v2424, %v2440
        %v2443 = vor.u32 %v2441, %v2442
        %v2444 = vsub.s32 4294967266, %v2439
        %v2445 = vadd.s32 %v2444, 127
        %v2446 = vshll.u32 %v2445, 23
        %v2447 = vor.u32 4788187, %v2446
        %v2448 = vand.u32 2147483647, %v2447
        %v2450 = vcvt.s32.f32 %v2443
        %v2451 = vmul.f32 %v2450, %v2448
        %v2452 = vxor.u32 %v2451, 2147483648
        %v2453 = vsel %vm2332, %v2452, %v2451
        %v2454 = vsub.s32 4, %v2430
        %v2455 = vsel %vm2332, %v2454, %v2430
        %v2456 = vsel %vm2331, %v308, %v2453
        %v2457 = vsel %vm2331, 0, %v2455
        %v2458 = vmul.f32 %v2456, %v2456
        %v2459 = vmul.f32 %v2458, -0.001358992
        %v2460 = vadd.f32 %v2459, 0.041655596
        %v2461 = vmul.f32 %v2458, %v2460
        %v2462 = vadd.f32 %v2461, -0.4999988
        %v2463 = vmul.f32 %v2458, %v2462
        %v2464 = vadd.f32 1.0, %v2463
        %v2465 = vmul.f32 %v2456, %v2456
        %v2466 = vmul.f32 %v2465, -0.00019511016
        %v2467 = vadd.f32 %v2466, 0.008332121
        %v2468 = vmul.f32 %v2465, %v2467
        %v2469 = vadd.f32 %v2468, -0.16666654
        %v2470 = vmul.f32 %v2465, %v2469
        %v2471 = vadd.f32 %v2470, 1.0
        %v2472 = vmul.f32 %v2471, %v2456
        %vm2473 = vweird.f32 %v308
        %v2474 = vadd.s32 %v2457, 3
        %v2475 = vand.u32 %v2474, 3
        %vm2476 = vcmp.lt.s32.totalorder %v2475, 2
        %vm2477 = vcmp.eq.s32.totalorder %v2475, 0
        %v2478 = vxor.u32 %v2472, 2147483648
        %v2479 = vsel %vm2477, %v2464, %v2478
        %vm2480 = vcmp.eq.s32.totalorder %v2475, 2
        %v2481 = vxor.u32 %v2464, 2147483648
        %v2482 = vsel %vm2480, %v2481, %v2472
        %v2483 = vsel %vm2476, %v2479, %v2482
        %v2484 = vsel %vm2473, nan, %v2483
        %v2485 = vand.u32 2147483647, %v311
        %vm2486 = vcmp.le.f32.partialorder %v2485, 0.7853982
        %vm2487 = vcmp.lt.s32.totalorder %v311, 0
        %v2488 = vand.u32 %v311, 2139095040
        %v2489 = vshrl.u32 %v2488, 23
        %v2490 = vsub.s32 %v2489, 127
        %v2491 = vand.u32 2147483647, %v311
        %v2492 = vand.u32 %v2491, 8388607
        %v2493 = vor.u32 %v2492, 8388608
        %v2494 = vsub.s32 0, %v2493
        %v2495 = vadd.s32 %v2490, 1
        %vm2496 = vcmp.gt.s32.totalorder %v2495, 0
        %v2497 = vsel %vm2496, %v2495, 0
        %v2498 = vshrl.u32 %v2497, 5
        %v2499 = vand.u32 %v2497, 31
        %v2500 = vsub.s32 32, %v2499
        %v2501 = vshrl.u32 683565275, %v2500
        %v2502 = vshll.u32 683565275, %v2499
        %v2503 = vshrl.u32 2475754826, %v2500
        %v2504 = vor.u32 %v2502, %v2503
        %v2505 = vshll.u32 2475754826, %v2499
        %v2506 = vshrl.u32 2131351028, %v2500
        %v2507 = vor.u32 %v2505, %v2506
        %v2508 = vshll.u32 2131351028, %v2499
        %v2509 = vshrl.u32 2102212464, %v2500
        %v2510 = vor.u32 %v2508, %v2509
        %v2511 = vshll.u32 2102212464, %v2499
        %v2512 = vshrl.u32 920167782, %v2500
        %v2513 = vor.u32 %v2511, %v2512
        %v2514 = vshll.u32 920167782, %v2499
        %v2515 = vshrl.u32 1326507024, %v2500
        %v2516 = vor.u32 %v2514, %v2515
        %vm2517 = vcmp.lt.s32.totalorder %v2498, 1
        %vm2518 = vcmp.lt.s32.totalorder %v2498, 2
        %vm2519 = vcmp.lt.s32.totalorder %v2498, 3
        %vm2520 = vcmp.lt.s32.totalorder %v2498, 4
        %v2521 = vsel %vm2517, %v2501, %v2504
        %v2522 = vsel %vm2520, %v2510, 2102212464
        %v2523 = vsel %vm2519, %v2507, %v2522
        %v2524 = vsel %vm2518, %v2521, %v2523
        %v2525 = vsel %vm2517, %v2504, %v2507
        %v2526 = vsel %vm2520, %v2513, 920167782
        %v2527 = vsel %vm2519, %v2510, %v2526
        %v2528 = vsel %vm2518, %v2525, %v2527
        %v2529 = vsel %vm2517, %v2507, %v2510
        %v2530 = vsel %vm2520, %v2516, 1326507024
        %v2531 = vsel %vm2519, %v2513, %v2530
        %v2532 = vsel %vm2518, %v2529, %v2531
        %v2533 = vshll.u32 %v2493, 8
        %v2534 = vand.u32 %v2533, 65535
        %v2535 = vshrl.u32 %v2533, 16
        %v2536 = vand.u32 %v2532, 65535
        %v2537 = vshrl.u32 %v2532, 16
        %v2538 = vmul.u32 %v2534, %v2536
        %v2539 = vmul.u32 %v2534, %v2537
        %v2540 = vmul.u32 %v2535, %v2536
        %v2541 = vmul.u32 %v2535, %v2537
        %v2542 = vshll.u32 %v2539, 16
        %v2543 = vshrl.u32 %v2539, 16
        %v2544 = vshll.u32 %v2540, 16
        %v2545 = vshrl.u32 %v2540, 16
        %vm2546 = vc.u32 %v2538, %v2542
        %v2547 = vsel %vm2546, 1, 0
        %v2548 = vadd.s32 %v2538, %v2542
        %v2549 = vadd.s32 %v2541, %v2547
        %vm2550 = vc.u32 %v2548, %v2544
        %v2551 = vsel %vm2550, 1, 0
        %v2552 = vadd.s32 %v2548, %v2544
        %v2553 = vadd.s32 %v2549, %v2551
        %v2554 = vadd.s32 %v2553, %v2543
        %v2555 = vadd.s32 %v2554, %v2545
        %v2556 = vand.u32 %v2533, 65535
        %v2557 = vshrl.u32 %v2533, 16
        %v2558 = vand.u32 %v2528, 65535
        %v2559 = vshrl.u32 %v2528, 16
        %v2560 = vmul.u32 %v2556, %v2558
        %v2561 = vmul.u32 %v2556, %v2559
        %v2562 = vmul.u32 %v2557, %v2558
        %v2563 = vmul.u32 %v2557, %v2559
        %v2564 = vshll.u32 %v2561, 16
        %v2565 = vshrl.u32 %v2561, 16
        %v2566 = vshll.u32 %v2562, 16
        %v2567 = vshrl.u32 %v2562, 16
        %vm2568 = vc.u32 %v2560, %v2564
        %v2569 = vsel %vm2568, 1, 0
        %v2570 = vadd.s32 %v2560, %v2564
        %v2571 = vadd.s32 %v2563, %v2569
        %vm2572 = vc.u32 %v2570, %v2566
        %v2573 = vsel %vm2572, 1, 0
        %v2574 = vadd.s32 %v2570, %v2566
        %v2575 = vadd.s32 %v2571, %v2573
        %v2576 = vadd.s32 %v2575, %v2565
        %v2577 = vadd.s32 %v2576, %v2567
        %v2578 = vmul.u32 %v2533, %v2524
        %v2579 = vadd.s32 %v2555, %v2574
        %vm2580 = vc.u32 %v2555, %v2574
        %v2581 = vadd.s32 %v2577, 1
        %v2582 = vsel %vm2580, %v2581, %v2577
        %v2583 = vadd.s32 %v2578, %v2582
        %v2584 = vadd.s32 %v2583, 536870912
        %v2585 = vshrl.u32 %v2584, 30
        %v2586 = vshll.u32 %v2585, 30
        %v2587 = vsub.s32 %v2583, %v2586
        %vm2588 = vcmp.lt.s32.totalorder %v2587, 0
        %v2589 = vsub.s32 0, %v2587
        %v2590 = vsel %vm2588, %v2589, %v2587
        %v2591 = vclz %v2590
        %v2592 = vsub.s32 %v2591, 2
        %vm2593 = vcmp.gt.s32.totalorder 0, %v2592
        %v2594 = vsel %vm2593, 0, %v2592
        %v2595 = vsub.s32 32, %v2594
        %v2596 = vshll.u32 %v2587, %v2594
        %v2597 = vshrl.u32 %v2579, %v2595
        %v2598 = vor.u32 %v2596, %v2597
        %v2599 = vsub.s32 4294967266, %v2594
        %v2600 = vadd.s32 %v2599, 127
        %v2601 = vshll.u32 %v2600, 23
        %v2602 = vor.u32 4788187, %v2601
        %v2603 = vand.u32 2147483647, %v2602
        %v2605 = vcvt.s32.f32 %v2598
        %v2606 = vmul.f32 %v2605, %v2603
        %v2607 = vxor.u32 %v2606, 2147483648
        %v2608 = vsel %vm2487, %v2607, %v2606
        %v2609 = vsub.s32 4, %v2585
        %v2610 = vsel %vm2487, %v2609, %v2585
        %v2611 = vsel %vm2486, %v311, %v2608
        %v2612 = vsel %vm2486, 0, %v2610
        %v2613 = vmul.f32 %v2611, %v2611
        %v2614 = vmul.f32 %v2613, -0.001358992
        %v2615 = vadd.f32 %v2614, 0.041655596
        %v2616 = vmul.f32 %v2613, %v2615
        %v2617 = vadd.f32 %v2616, -0.4999988
        %v2618 = vmul.f32 %v2613, %v2617
        %v2619 = vadd.f32 1.0, %v2618
        %v2620 = vmul.f32 %v2611, %v2611
        %v2621 = vmul.f32 %v2620, -0.00019511016
        %v2622 = vadd.f32 %v2621, 0.008332121
        %v2623 = vmul.f32 %v2620, %v2622
        %v2624 = vadd.f32 %v2623, -0.16666654
        %v2625 = vmul.f32 %v2620, %v2624
        %v2626 = vadd.f32 %v2625, 1.0
        %v2627 = vmul.f32 %v2626, %v2611
        %vm2628 = vweird.f32 %v311
        %v2629 = vadd.s32 %v2612, 3
        %v2630 = vand.u32 %v2629, 3
        %vm2631 = vcmp.lt.s32.totalorder %v2630, 2
        %vm2632 = vcmp.eq.s32.totalorder %v2630, 0
        %v2633 = vxor.u32 %v2627, 2147483648
        %v2634 = vsel %vm2632, %v2619, %v2633
        %vm2635 = vcmp.eq.s32.totalorder %v2630, 2
        %v2636 = vxor.u32 %v2619, 2147483648
        %v2637 = vsel %vm2635, %v2636, %v2627
        %v2638 = vsel %vm2631, %v2634, %v2637
        %v2639 = vsel %vm2628, nan, %v2638
        %v2640 = vand.u32 2147483647, %v313
        %vm2641 = vcmp.le.f32.partialorder %v2640, 0.7853982
        %vm2642 = vcmp.lt.s32.totalorder %v313, 0
        %v2643 = vand.u32 %v313, 2139095040
        %v2644 = vshrl.u32 %v2643, 23
        %v2645 = vsub.s32 %v2644, 127
        %v2646 = vand.u32 2147483647, %v313
        %v2647 = vand.u32 %v2646, 8388607
        %v2648 = vor.u32 %v2647, 8388608
        %v2649 = vsub.s32 0, %v2648
        %v2650 = vadd.s32 %v2645, 1
        %vm2651 = vcmp.gt.s32.totalorder %v2650, 0
        %v2652 = vsel %vm2651, %v2650, 0
        %v2653 = vshrl.u32 %v2652, 5
        %v2654 = vand.u32 %v2652, 31
        %v2655 = vsub.s32 32, %v2654
        %v2656 = vshrl.u32 683565275, %v2655
        %v2657 = vshll.u32 683565275, %v2654
        %v2658 = vshrl.u32 2475754826, %v2655
        %v2659 = vor.u32 %v2657, %v2658
        %v2660 = vshll.u32 2475754826, %v2654
        %v2661 = vshrl.u32 2131351028, %v2655
        %v2662 = vor.u32 %v2660, %v2661
        %v2663 = vshll.u32 2131351028, %v2654
        %v2664 = vshrl.u32 2102212464, %v2655
        %v2665 = vor.u32 %v2663, %v2664
        %v2666 = vshll.u32 2102212464, %v2654
        %v2667 = vshrl.u32 920167782, %v2655
        %v2668 = vor.u32 %v2666, %v2667
        %v2669 = vshll.u32 920167782, %v2654
        %v2670 = vshrl.u32 1326507024, %v2655
        %v2671 = vor.u32 %v2669, %v2670
        %vm2672 = vcmp.lt.s32.totalorder %v2653, 1
        %vm2673 = vcmp.lt.s32.totalorder %v2653, 2
        %vm2674 = vcmp.lt.s32.totalorder %v2653, 3
        %vm2675 = vcmp.lt.s32.totalorder %v2653, 4
        %v2676 = vsel %vm2672, %v2656, %v2659
        %v2677 = vsel %vm2675, %v2665, 2102212464
        %v2678 = vsel %vm2674, %v2662, %v2677
        %v2679 = vsel %vm2673, %v2676, %v2678
        %v2680 = vsel %vm2672, %v2659, %v2662
        %v2681 = vsel %vm2675, %v2668, 920167782
        %v2682 = vsel %vm2674, %v2665, %v2681
        %v2683 = vsel %vm2673, %v2680, %v2682
        %v2684 = vsel %vm2672, %v2662, %v2665
        %v2685 = vsel %vm2675, %v2671, 1326507024
        %v2686 = vsel %vm2674, %v2668, %v2685
        %v2687 = vsel %vm2673, %v2684, %v2686
        %v2688 = vshll.u32 %v2648, 8
        %v2689 = vand.u32 %v2688, 65535
        %v2690 = vshrl.u32 %v2688, 16
        %v2691 = vand.u32 %v2687, 65535
        %v2692 = vshrl.u32 %v2687, 16
        %v2693 = vmul.u32 %v2689, %v2691
        %v2694 = vmul.u32 %v2689, %v2692
        %v2695 = vmul.u32 %v2690, %v2691
        %v2696 = vmul.u32 %v2690, %v2692
        %v2697 = vshll.u32 %v2694, 16
        %v2698 = vshrl.u32 %v2694, 16
        %v2699 = vshll.u32 %v2695, 16
        %v2700 = vshrl.u32 %v2695, 16
        %vm2701 = vc.u32 %v2693, %v2697
        %v2702 = vsel %vm2701, 1, 0
        %v2703 = vadd.s32 %v2693, %v2697
        %v2704 = vadd.s32 %v2696, %v2702
        %vm2705 = vc.u32 %v2703, %v2699
        %v2706 = vsel %vm2705, 1, 0
        %v2707 = vadd.s32 %v2703, %v2699
        %v2708 = vadd.s32 %v2704, %v2706
        %v2709 = vadd.s32 %v2708, %v2698
        %v2710 = vadd.s32 %v2709, %v2700
        %v2711 = vand.u32 %v2688, 65535
        %v2712 = vshrl.u32 %v2688, 16
        %v2713 = vand.u32 %v2683, 65535
        %v2714 = vshrl.u32 %v2683, 16
        %v2715 = vmul.u32 %v2711, %v2713
        %v2716 = vmul.u32 %v2711, %v2714
        %v2717 = vmul.u32 %v2712, %v2713
        %v2718 = vmul.u32 %v2712, %v2714
        %v2719 = vshll.u32 %v2716, 16
        %v2720 = vshrl.u32 %v2716, 16
        %v2721 = vshll.u32 %v2717, 16
        %v2722 = vshrl.u32 %v2717, 16
        %vm2723 = vc.u32 %v2715, %v2719
        %v2724 = vsel %vm2723, 1, 0
        %v2725 = vadd.s32 %v2715, %v2719
        %v2726 = vadd.s32 %v2718, %v2724
        %vm2727 = vc.u32 %v2725, %v2721
        %v2728 = vsel %vm2727, 1, 0
        %v2729 = vadd.s32 %v2725, %v2721
        %v2730 = vadd.s32 %v2726, %v2728
        %v2731 = vadd.s32 %v2730, %v2720
        %v2732 = vadd.s32 %v2731, %v2722
        %v2733 = vmul.u32 %v2688, %v2679
        %v2734 = vadd.s32 %v2710, %v2729
        %vm2735 = vc.u32 %v2710, %v2729
        %v2736 = vadd.s32 %v2732, 1
        %v2737 = vsel %vm2735, %v2736, %v2732
        %v2738 = vadd.s32 %v2733, %v2737
        %v2739 = vadd.s32 %v2738, 536870912
        %v2740 = vshrl.u32 %v2739, 30
        %v2741 = vshll.u32 %v2740, 30
        %v2742 = vsub.s32 %v2738, %v2741
        %vm2743 = vcmp.lt.s32.totalorder %v2742, 0
        %v2744 = vsub.s32 0, %v2742
        %v2745 = vsel %vm2743, %v2744, %v2742
        %v2746 = vclz %v2745
        %v2747 = vsub.s32 %v2746, 2
        %vm2748 = vcmp.gt.s32.totalorder 0, %v2747
        %v2749 = vsel %vm2748, 0, %v2747
        %v2750 = vsub.s32 32, %v2749
        %v2751 = vshll.u32 %v2742, %v2749
        %v2752 = vshrl.u32 %v2734, %v2750
        %v2753 = vor.u32 %v2751, %v2752
        %v2754 = vsub.s32 4294967266, %v2749
        %v2755 = vadd.s32 %v2754, 127
        %v2756 = vshll.u32 %v2755, 23
        %v2757 = vor.u32 4788187, %v2756
        %v2758 = vand.u32 2147483647, %v2757
        %v2760 = vcvt.s32.f32 %v2753
        %v2761 = vmul.f32 %v2760, %v2758
        %v2762 = vxor.u32 %v2761, 2147483648
        %v2763 = vsel %vm2642, %v2762, %v2761
        %v2764 = vsub.s32 4, %v2740
        %v2765 = vsel %vm2642, %v2764, %v2740
        %v2766 = vsel %vm2641, %v313, %v2763
        %v2767 = vsel %vm2641, 0, %v2765
        %v2768 = vmul.f32 %v2766, %v2766
        %v2769 = vmul.f32 %v2768, -0.001358992
        %v2770 = vadd.f32 %v2769, 0.041655596
        %v2771 = vmul.f32 %v2768, %v2770
        %v2772 = vadd.f32 %v2771, -0.4999988
        %v2773 = vmul.f32 %v2768, %v2772
        %v2774 = vadd.f32 1.0, %v2773
        %v2775 = vmul.f32 %v2766, %v2766
        %v2776 = vmul.f32 %v2775, -0.00019511016
        %v2777 = vadd.f32 %v2776, 0.008332121
        %v2778 = vmul.f32 %v2775, %v2777
        %v2779 = vadd.f32 %v2778, -0.16666654
        %v2780 = vmul.f32 %v2775, %v2779
        %v2781 = vadd.f32 %v2780, 1.0
        %v2782 = vmul.f32 %v2781, %v2766
        %vm2783 = vweird.f32 %v313
        %v2784 = vadd.s32 %v2767, 3
        %v2785 = vand.u32 %v2784, 3
        %vm2786 = vcmp.lt.s32.totalorder %v2785, 2
        %vm2787 = vcmp.eq.s32.totalorder %v2785, 0
        %v2788 = vxor.u32 %v2782, 2147483648
        %v2789 = vsel %vm2787, %v2774, %v2788
        %vm2790 = vcmp.eq.s32.totalorder %v2785, 2
        %v2791 = vxor.u32 %v2774, 2147483648
        %v2792 = vsel %vm2790, %v2791, %v2782
        %v2793 = vsel %vm2786, %v2789, %v2792
        %v2794 = vsel %vm2783, nan, %v2793
        %v2795 = vpack.c.bf16 %v469, %v469
        %v2796 = vpack.c.bf16 %v624, %v624
        %v2797 = vpack.c.bf16 %v779, %v779
        %v2798 = vpack.c.bf16 %v934, %v934
        %v2799 = vpack.c.bf16 %v1089, %v1089
        %v2800 = vpack.c.bf16 %v1244, %v1244
        %v2801 = vpack.c.bf16 %v1399, %v1399
        %v2802 = vpack.c.bf16 %v1554, %v1554
        %v2803 = vpack.c.bf16 %v1709, %v1709
        %v2804 = vpack.c.bf16 %v1864, %v1864
        %v2805 = vpack.c.bf16 %v2019, %v2019
        %v2806 = vpack.c.bf16 %v2174, %v2174
        %v2807 = vpack.c.bf16 %v2329, %v2329
        %v2808 = vpack.c.bf16 %v2484, %v2484
        %v2809 = vpack.c.bf16 %v2639, %v2639
        %v2810 = vpack.c.bf16 %v2794, %v2794
        %2811 = vst [vmem:[%s164] sm:$0xf] %v2795
        %2812 = vst [vmem:[%s164 + $0x4] sm:$0xf] %v2796
        %2813 = vst [vmem:[%s164 + $0x8] sm:$0xf] %v2797
        %2814 = vst [vmem:[%s164 + $0xc] sm:$0xf] %v2798
        %2815 = vst [vmem:[%s164 + $0x10] sm:$0xf] %v2799
        %2816 = vst [vmem:[%s164 + $0x14] sm:$0xf] %v2800
        %2817 = vst [vmem:[%s164 + $0x18] sm:$0xf] %v2801
        %2818 = vst [vmem:[%s164 + $0x1c] sm:$0xf] %v2802
        %2819 = vst [vmem:[%s164 + $0x20] sm:$0xf] %v2803
        %2820 = vst [vmem:[%s164 + $0x24] sm:$0xf] %v2804
        %2821 = vst [vmem:[%s164 + $0x28] sm:$0xf] %v2805
        %2822 = vst [vmem:[%s164 + $0x2c] sm:$0xf] %v2806
        %2823 = vst [vmem:[%s164 + $0x30] sm:$0xf] %v2807
        %2824 = vst [vmem:[%s164 + $0x34] sm:$0xf] %v2808
        %2825 = vst [vmem:[%s164 + $0x38] sm:$0xf] %v2809
        %2826 = vst [vmem:[%s164 + $0x3c] sm:$0xf] %v2810
        %s2827 = sand.u32 %s93, 1
        %s2828 = scalar_lea.sflag [#allocation3], %s2827
        %s2829 = sand.u32 %s93, 1
        %s2830 = smul.addr %s2829, 64
        %s2831 = scalar_lea.vmem [#allocation2], %s2830
        // Predicated region
        $region33: #{tpu_custom_call.1} parent=31 // pred_check
          %p2832 = pneg %p103
        $region34: #{tpu_custom_call.1} parent=31 // pred_check_branch
          %2834 = sbr.rel (%p2832) target = $region36
        $region35: #{tpu_custom_call.1} parent=31 // pred_region
          %s2835 = smul.u32 16, %s17
          %2837 = vsyncadd %s2828, 0
          %s2838 = smul.addr %s2835, 4
          %s2839 = scalar_lea.hbm %s3, %s2838
          %s2840 = sshll.u32 %s2831, 4
          %s2841 = int_to_ptr.vmem [resolvable:$true] %s2840
          %s2842 = sshll.u32 %s2839, 4
          %s2843 = int_to_ptr.hbm [resolvable:$true] %s2842
          %2848 = dma.vmem_to_hbm [thread:$0]  %s2841, 1024, %s2843, %s2828, 64, 64, 4
        $region36: #{tpu_custom_call.1} parent=31 // pred_fallthru
          _
      $region32: #{tpu_custom_call.1} parent=5 // pred_fallthru
        _
      %p2849 = scmp.le.s32.totalorder 2, %s12
      // Predicated region
      $region37: #{tpu_custom_call.1} parent=5 // pred_check
        %p2850 = pneg %p2849
      $region38: #{tpu_custom_call.1} parent=5 // pred_check_branch
        %2852 = sbr.rel (%p2850) target = $region40
      $region39: #{tpu_custom_call.1} parent=5 // pred_region
        %s2853 = ssub.s32 %s12, 2
        // Predicated region
        $region41: #{tpu_custom_call.1} parent=39 // pred_check
          %p2854 = pneg %p109
        $region42: #{tpu_custom_call.1} parent=39 // pred_check_branch
          %2856 = sbr.rel (%p2854) target = $region44
        $region43: #{tpu_custom_call.1} parent=39 // pred_region
          %s2857 = sand.u32 %s94, 1
          %s2858 = scalar_lea.sflag [#allocation3], %s2857
          %s2859 = sand.u32 %s94, 1
          %s2860 = smul.addr %s2859, 64
          %s2861 = scalar_lea.vmem [#allocation2], %s2860
          %2863 = dma.done %s2858, 1024
        $region44: #{tpu_custom_call.1} parent=39 // pred_fallthru
          _
      $region40: #{tpu_custom_call.1} parent=5 // pred_fallthru
        _
    $region6: #{tpu_custom_call.1} parent=1 // loop_footer
      %s16 = sadd.s32 1, %s12
    $region7: #{tpu_custom_call.1} parent=1 // loop_footer_branch
      %11 = sbr.rel target = $region3
    $region8: #{tpu_custom_call.1} parent=1 // loop_exit
      _
    %2864 = vsyncpa [#allocation3], 1
    %s2865 = scalar_lea.sflag [#allocation3], 1
    %2866 = vsyncpa %s2865, 1

</llo_original>
